<compile_context>
chip_gen: v5e
topology: v5e:2x2
jax: 0.10.0
libtpu: 0.0.40
codegen_flags: <defaults>
</compile_context>

<pallas_src>
import math
import numpy as np
import jax
import jax.numpy as jnp
from jax import lax
from jax.experimental import pallas as pl
from jax.experimental.pallas import tpu as pltpu


# ----------------------------- hyperparameters (the `h` dict) -----------------------------
H = {
    "char_vocab_size": 64,
    "char_embedding_size": 8,                 # E
    "conv_activation": "relu",                # ConvSegment supports relu/gelu/sigmoid
    "attn_conv.kernel|filter_sizes": [(5, 32), (3, 32)],
}


# ------------------------------------ Pallas kernel ---------------------------------------
def make_kernel(layer_meta, V, S, bblk):
    """layer_meta: list of (pad_left, k) per ConvSegment conv.

    Kernel refs:
      x_ref     (1, bblk, S)    int32  char ids
      emb_t_ref (E, V)          f32    embedding table, transposed
      per conv layer: w_ref (Cout, k*Cin) f32, b_ref (Cout, 1) f32
      wf_ref    (8, C_last)     f32    final 1x1 conv weight, zero padded to 8 rows
      bf_ref    (1, 1)          f32
      out_ref   (1, 1, bblk*S)  f32    lane-dense logits row
    """

    def kernel(x_ref, emb_t_ref, *refs):
        out_ref = refs[-1]
        params = refs[:-1]

        # ---- fused embedding gather as a one-hot MXU matmul (channels-first result) ----
        xb = x_ref[0]                                            # (bblk, S) int32
        v_iota = lax.broadcasted_iota(jnp.int32, (V, S), 0)      # (V, S)
        parts = []
        for b in range(bblk):
            ids_row = xb[b:b + 1, :]                             # (1, S)
            onehot = (v_iota == ids_row).astype(jnp.float32)     # (V, S)
            parts.append(jnp.dot(emb_t_ref[...], onehot,
                                 preferred_element_type=jnp.float32))   # (E, S)
        h = jnp.concatenate(parts, axis=1) if bblk > 1 else parts[0]     # (E, bblk*S)

        # lane index within one batch row, for masking conv taps at sequence edges
        t_idx = lax.broadcasted_iota(jnp.int32, (1, S), 1)       # (1, S)

        # ---- ConvSegment: each conv = one im2col matmul, taps via XLU lane rolls ----
        for li, (p0, k) in enumerate(layer_meta):
            w_ref = params[2 * li]                               # (Cout, k*Cin)
            b_ref = params[2 * li + 1]                           # (Cout, 1)
            if k > 1:
                # boundary masks depend only on the tap shift d; hoist out of batch loop
                masks = {}
                for j in range(k):
                    d = j - p0
                    if d != 0:
                        masks[d] = (t_idx + d >= 0) & (t_idx + d < S)    # (1, S)
                cols = []
                for b in range(bblk):
                    hb = h[:, b * S:(b + 1) * S]                 # (Cin, S) lane-aligned
                    taps = []
                    for j in range(k):
                        d = j - p0
                        if d == 0:
                            taps.append(hb)
                        else:
                            rolled = pltpu.roll(hb, shift=(-d) % S, axis=1)
                            taps.append(jnp.where(masks[d], rolled, 0.0))
                    cols.append(jnp.concatenate(taps, axis=0))   # (k*Cin, S)
                xs = jnp.concatenate(cols, axis=1) if bblk > 1 else cols[0]  # (k*Cin, bblk*S)
            else:
                xs = h
            # conv_activation == 'relu' (ConvSegment applies it after every conv)
            h = jnp.maximum(
                jnp.dot(w_ref[...], xs, preferred_element_type=jnp.float32) + b_ref[...],
                0.0,
            )                                                    # (Cout, bblk*S)

        # ---- final 1x1 conv to one channel, no activation; (8, bblk*S) lane-dense ----
        wf_ref = params[2 * len(layer_meta)]                     # (8, C_last)
        bf_ref = params[2 * len(layer_meta) + 1]                 # (1, 1)
        lg = jnp.dot(wf_ref[...], h, preferred_element_type=jnp.float32)  # (8, bblk*S)
        out_ref[0] = (lg[0:1, :] + bf_ref[...]).astype(out_ref.dtype)

    return kernel


def tok_start_attn_pallas(x_idx, emb_t, conv_params, final_w8, final_b11, layer_meta):
    """x_idx: (B, S) int32.  emb_t: (E, V) f32.  conv_params: [(w2t (cout,k*cin), b (cout,1))]."""
    B, S = x_idx.shape
    V = emb_t.shape[1]

    # >=2 batch rows per step amortizes per-step overhead; grid stays >=2 (and even)
    # so both v7x TensorCores get work.  v5e/v6e just iterate the grid serially.
    bblk = 2 if B % 2 == 0 else 1
    g = B // bblk
    x3 = x_idx.reshape(g, bblk, S)

    in_specs = [pl.BlockSpec((1, bblk, S), lambda i: (i, 0, 0)),
                pl.BlockSpec(emb_t.shape, lambda i: (0, 0))]
    operands = [x3, emb_t]
    for w2t, bias in conv_params:
        in_specs.append(pl.BlockSpec(w2t.shape, lambda i: (0, 0)))
        in_specs.append(pl.BlockSpec(bias.shape, lambda i: (0, 0)))
        operands += [w2t, bias]
    in_specs.append(pl.BlockSpec(final_w8.shape, lambda i: (0, 0)))
    in_specs.append(pl.BlockSpec(final_b11.shape, lambda i: (0, 0)))
    operands += [final_w8, final_b11]

    out_spec = pl.BlockSpec((1, 1, bblk * S), lambda i: (i, 0, 0))   # lane-dense store

    out = pl.pallas_call(
        make_kernel(layer_meta, V, S, bblk),
        out_shape=jax.ShapeDtypeStruct((g, 1, bblk * S), jnp.float32),
        grid_spec=pltpu.PrefetchScalarGridSpec(
            num_scalar_prefetch=0,
            grid=(g,),
            in_specs=in_specs,
            out_specs=out_spec,
        ),
        compiler_params=pltpu.CompilerParams(dimension_semantics=("parallel",)),
    )(*operands)
    # (g, 1, bblk*S) rows are [batch g*bblk + b, t] in lane order -> contiguous reshape
    return out.reshape(B, S)


# ------------------------------------ JAX glue / wrapper -----------------------------------
def tok_start_attn_forward(x_idx, emb_tab, conv_weights, final_w, final_b, kfs):
    # Parameter prep only (done once): transpose the embedding table for the in-kernel
    # one-hot matmul and flatten each conv weight to (Cout, k*Cin) channels-first.
    emb_t = jnp.transpose(emb_tab).astype(jnp.float32)           # (E, V)

    layer_meta = []
    conv_params = []
    first = True
    for (k, f), (w, b) in zip(kfs, conv_weights):
        start_pad = k // 2 if first else 0                       # center_start_pad=True
        first = False
        layer_meta.append((start_pad, k))
        cin = w.shape[1]
        w2t = jnp.transpose(w.reshape(k * cin, f))               # (cout, k*cin): [o, j*cin+c]=w[j,c,o]
        conv_params.append((w2t, b.reshape(f, 1)))

    c_last = kfs[-1][1]
    final_w8 = jnp.concatenate([final_w, jnp.zeros((7, c_last), jnp.float32)], axis=0)  # (8, C)
    final_b11 = final_b.reshape(1, 1)
    return tok_start_attn_pallas(x_idx, emb_t, conv_params, final_w8, final_b11, layer_meta)


# ------------------------------------ pure-JAX reference -----------------------------------
def reference_forward(x_idx, emb_tab, conv_weights, final_w, final_b, kfs):
    e = emb_tab[x_idx]                                           # (B, S, E)
    h = jnp.transpose(e, (0, 2, 1))                              # (B, E, S) NCW like PyTorch
    first = True
    for (k, f), (w, b) in zip(kfs, conv_weights):
        start_pad = k // 2 if first else 0
        first = False
        hp = jnp.pad(h, ((0, 0), (0, 0), (start_pad, k - 1 - start_pad)))
        w_oik = jnp.transpose(w, (2, 1, 0))                      # (out, in, k) torch layout
        h = lax.conv_general_dilated(
            hp, w_oik, window_strides=(1,), padding="VALID",
            dimension_numbers=("NCH", "OIH", "NCH"))
        h = h + b[0][None, :, None]
        h = jnp.maximum(h, 0.0)                                  # ReLU after every seg conv
    logits = jnp.einsum("bcs,c->bs", h, final_w[0]) + final_b[0]
    return logits


# -------------------------------------------- main -----------------------------------------
if __name__ == "__main__":
    B, S = 4, 512
    V = H["char_vocab_size"]
    E = H["char_embedding_size"]
    kfs = H["attn_conv.kernel|filter_sizes"]

    key = jax.random.PRNGKey(0)
    keys = jax.random.split(key, 8)

    # deterministic synthetic parameters (shapes follow the module __init__)
    emb_tab = jax.random.normal(keys[0], (V, E), dtype=jnp.float32) * 0.1

    conv_weights = []
    c_in = E
    ki = 1
    for (k, f) in kfs:                                           # ConvSegment convs
        fan = c_in * k
        w = jax.random.normal(keys[ki], (k, c_in, f), dtype=jnp.float32) / math.sqrt(fan)
        b = jax.random.normal(keys[ki + 1], (1, f), dtype=jnp.float32) * 0.01
        conv_weights.append((w, b))
        c_in = f
        ki += 2
    # final_conv: Conv1d(conv_out_size, 1, 1), no activation
    final_w = jax.random.normal(keys[ki], (1, c_in), dtype=jnp.float32) / math.sqrt(c_in)
    final_b = jax.random.normal(keys[ki + 1], (1,), dtype=jnp.float32) * 0.01
    ki += 2

    # input char ids (B, S)
    x_idx = jax.random.randint(keys[ki], (B, S), 0, V, dtype=jnp.int32)

    out = jax.block_until_ready(
        tok_start_attn_forward(x_idx, emb_tab, conv_weights, final_w, final_b, kfs))
    ref = jax.block_until_ready(
        reference_forward(x_idx, emb_tab, conv_weights, final_w, final_b, kfs))

    assert out.shape == (B, S), out.shape
    np.testing.assert_allclose(np.asarray(out), np.asarray(ref), rtol=1e-4, atol=1e-5)

    print("KERNEL_OK")
</pallas_src>

<mosaic_0001>
module attributes {stable_mosaic.version = 11 : i64} {
  func.func @kernel(%arg0: i32, %arg1: memref<1x2x512xi32, #tpu.memory_space<vmem>>, %arg2: memref<8x64xf32, #tpu.memory_space<vmem>>, %arg3: memref<32x40xf32, #tpu.memory_space<vmem>>, %arg4: memref<32x1xf32, #tpu.memory_space<vmem>>, %arg5: memref<32x96xf32, #tpu.memory_space<vmem>>, %arg6: memref<32x1xf32, #tpu.memory_space<vmem>>, %arg7: memref<8x32xf32, #tpu.memory_space<vmem>>, %arg8: memref<1x1xf32, #tpu.memory_space<vmem>>, %arg9: memref<1x1x1024xf32, #tpu.memory_space<vmem>>) attributes {dimension_semantics = [#tpu.dimension_semantics<parallel>], iteration_bounds = array<i64: 2>, scalar_prefetch = 0 : i64, scratch_operands = 0 : i64, tpu.core_type = #tpu.core_type<tc>, window_params = [{transform_indices = @transform_0, window_bounds = array<i64: 1, 2, 512>}, {pipeline_mode = #tpu.pipeline_mode<synchronous>, transform_indices = @transform_1, window_bounds = array<i64: 8, 64>}, {pipeline_mode = #tpu.pipeline_mode<synchronous>, transform_indices = @transform_2, window_bounds = array<i64: 32, 40>}, {pipeline_mode = #tpu.pipeline_mode<synchronous>, transform_indices = @transform_3, window_bounds = array<i64: 32, 1>}, {pipeline_mode = #tpu.pipeline_mode<synchronous>, transform_indices = @transform_4, window_bounds = array<i64: 32, 96>}, {pipeline_mode = #tpu.pipeline_mode<synchronous>, transform_indices = @transform_5, window_bounds = array<i64: 32, 1>}, {pipeline_mode = #tpu.pipeline_mode<synchronous>, transform_indices = @transform_6, window_bounds = array<i64: 8, 32>}, {pipeline_mode = #tpu.pipeline_mode<synchronous>, transform_indices = @transform_7, window_bounds = array<i64: 1, 1>}, {transform_indices = @transform_8, window_bounds = array<i64: 1, 1, 1024>}]} {
    %c0 = arith.constant 0 : index
    %c0_0 = arith.constant 0 : index
    %c0_1 = arith.constant 0 : index
    %0 = vector.load %arg1[%c0, %c0_0, %c0_1] : memref<1x2x512xi32, #tpu.memory_space<vmem>>, vector<1x2x512xi32>
    %1 = vector.shape_cast %0 : vector<1x2x512xi32> to vector<2x512xi32>
    %2 = tpu.iota {dimensions = array<i32: 0>} : vector<64x512xi32>
    %3 = vector.extract_strided_slice %1 {offsets = [0, 0], sizes = [1, 512], strides = [1, 1]} : vector<2x512xi32> to vector<1x512xi32>
    %4 = vector.broadcast %3 : vector<1x512xi32> to vector<64x512xi32>
    %5 = arith.cmpi eq, %2, %4 : vector<64x512xi32>
    %6 = arith.extui %5 : vector<64x512xi1> to vector<64x512xi32>
    %7 = arith.sitofp %6 : vector<64x512xi32> to vector<64x512xf32>
    %c0_2 = arith.constant 0 : index
    %c0_3 = arith.constant 0 : index
    %8 = vector.load %arg2[%c0_2, %c0_3] : memref<8x64xf32, #tpu.memory_space<vmem>>, vector<8x64xf32>
    %cst = arith.constant dense<0.000000e+00> : vector<8x512xf32>
    %9 = tpu.matmul %8, %7, %cst {dimension_numbers = #tpu.dot_dimension_numbers<[1], [0], [0], [1], [0, 0, 1, 1], [], []>} : vector<8x64xf32>, vector<64x512xf32>, vector<8x512xf32> -> vector<8x512xf32>
    %10 = vector.extract_strided_slice %1 {offsets = [1, 0], sizes = [1, 512], strides = [1, 1]} : vector<2x512xi32> to vector<1x512xi32>
    %11 = vector.broadcast %10 : vector<1x512xi32> to vector<64x512xi32>
    %12 = arith.cmpi eq, %2, %11 : vector<64x512xi32>
    %13 = arith.extui %12 : vector<64x512xi1> to vector<64x512xi32>
    %14 = arith.sitofp %13 : vector<64x512xi32> to vector<64x512xf32>
    %c0_4 = arith.constant 0 : index
    %c0_5 = arith.constant 0 : index
    %15 = vector.load %arg2[%c0_4, %c0_5] : memref<8x64xf32, #tpu.memory_space<vmem>>, vector<8x64xf32>
    %cst_6 = arith.constant dense<0.000000e+00> : vector<8x512xf32>
    %16 = tpu.matmul %15, %14, %cst_6 {dimension_numbers = #tpu.dot_dimension_numbers<[1], [0], [0], [1], [0, 0, 1, 1], [], []>} : vector<8x64xf32>, vector<64x512xf32>, vector<8x512xf32> -> vector<8x512xf32>
    %17 = tpu.concatenate %9, %16 in 1 : vector<8x512xf32>, vector<8x512xf32> -> vector<8x1024xf32>
    %18 = tpu.iota {dimensions = array<i32: 1>} : vector<1x512xi32>
    %c-2_i32 = arith.constant -2 : i32
    %19 = vector.broadcast %c-2_i32 : i32 to vector<1x512xi32>
    %20 = arith.addi %18, %19 : vector<1x512xi32>
    %c0_i32 = arith.constant 0 : i32
    %21 = vector.broadcast %c0_i32 : i32 to vector<1x512xi32>
    %22 = arith.cmpi sge, %20, %21 : vector<1x512xi32>
    %c-2_i32_7 = arith.constant -2 : i32
    %23 = vector.broadcast %c-2_i32_7 : i32 to vector<1x512xi32>
    %24 = arith.addi %18, %23 : vector<1x512xi32>
    %c512_i32 = arith.constant 512 : i32
    %25 = vector.broadcast %c512_i32 : i32 to vector<1x512xi32>
    %26 = arith.cmpi slt, %24, %25 : vector<1x512xi32>
    %27 = arith.andi %22, %26 : vector<1x512xi1>
    %c-1_i32 = arith.constant -1 : i32
    %28 = vector.broadcast %c-1_i32 : i32 to vector<1x512xi32>
    %29 = arith.addi %18, %28 : vector<1x512xi32>
    %c0_i32_8 = arith.constant 0 : i32
    %30 = vector.broadcast %c0_i32_8 : i32 to vector<1x512xi32>
    %31 = arith.cmpi sge, %29, %30 : vector<1x512xi32>
    %c-1_i32_9 = arith.constant -1 : i32
    %32 = vector.broadcast %c-1_i32_9 : i32 to vector<1x512xi32>
    %33 = arith.addi %18, %32 : vector<1x512xi32>
    %c512_i32_10 = arith.constant 512 : i32
    %34 = vector.broadcast %c512_i32_10 : i32 to vector<1x512xi32>
    %35 = arith.cmpi slt, %33, %34 : vector<1x512xi32>
    %36 = arith.andi %31, %35 : vector<1x512xi1>
    %c1_i32 = arith.constant 1 : i32
    %37 = vector.broadcast %c1_i32 : i32 to vector<1x512xi32>
    %38 = arith.addi %18, %37 : vector<1x512xi32>
    %c0_i32_11 = arith.constant 0 : i32
    %39 = vector.broadcast %c0_i32_11 : i32 to vector<1x512xi32>
    %40 = arith.cmpi sge, %38, %39 : vector<1x512xi32>
    %c1_i32_12 = arith.constant 1 : i32
    %41 = vector.broadcast %c1_i32_12 : i32 to vector<1x512xi32>
    %42 = arith.addi %18, %41 : vector<1x512xi32>
    %c512_i32_13 = arith.constant 512 : i32
    %43 = vector.broadcast %c512_i32_13 : i32 to vector<1x512xi32>
    %44 = arith.cmpi slt, %42, %43 : vector<1x512xi32>
    %45 = arith.andi %40, %44 : vector<1x512xi1>
    %c2_i32 = arith.constant 2 : i32
    %46 = vector.broadcast %c2_i32 : i32 to vector<1x512xi32>
    %47 = arith.addi %18, %46 : vector<1x512xi32>
    %c0_i32_14 = arith.constant 0 : i32
    %48 = vector.broadcast %c0_i32_14 : i32 to vector<1x512xi32>
    %49 = arith.cmpi sge, %47, %48 : vector<1x512xi32>
    %c2_i32_15 = arith.constant 2 : i32
    %50 = vector.broadcast %c2_i32_15 : i32 to vector<1x512xi32>
    %51 = arith.addi %18, %50 : vector<1x512xi32>
    %c512_i32_16 = arith.constant 512 : i32
    %52 = vector.broadcast %c512_i32_16 : i32 to vector<1x512xi32>
    %53 = arith.cmpi slt, %51, %52 : vector<1x512xi32>
    %54 = arith.andi %49, %53 : vector<1x512xi1>
    %55 = vector.extract_strided_slice %17 {offsets = [0, 0], sizes = [8, 512], strides = [1, 1]} : vector<8x1024xf32> to vector<8x512xf32>
    %c2_i32_17 = arith.constant 2 : i32
    %56 = tpu.dynamic_rotate %55 by %c2_i32_17 dim 1 : vector<8x512xf32>, i32 -> vector<8x512xf32>
    %cst_18 = arith.constant 0.000000e+00 : f32
    %57 = vector.shape_cast %27 : vector<1x512xi1> to vector<1x512xi1>
    %58 = vector.broadcast %57 : vector<1x512xi1> to vector<8x512xi1>
    %59 = vector.broadcast %cst_18 : f32 to vector<8x512xf32>
    %60 = arith.select %58, %56, %59 : vector<8x512xi1>, vector<8x512xf32>
    %c1_i32_19 = arith.constant 1 : i32
    %61 = tpu.dynamic_rotate %55 by %c1_i32_19 dim 1 : vector<8x512xf32>, i32 -> vector<8x512xf32>
    %cst_20 = arith.constant 0.000000e+00 : f32
    %62 = vector.shape_cast %36 : vector<1x512xi1> to vector<1x512xi1>
    %63 = vector.broadcast %62 : vector<1x512xi1> to vector<8x512xi1>
    %64 = vector.broadcast %cst_20 : f32 to vector<8x512xf32>
    %65 = arith.select %63, %61, %64 : vector<8x512xi1>, vector<8x512xf32>
    %c511_i32 = arith.constant 511 : i32
    %66 = tpu.dynamic_rotate %55 by %c511_i32 dim 1 : vector<8x512xf32>, i32 -> vector<8x512xf32>
    %cst_21 = arith.constant 0.000000e+00 : f32
    %67 = vector.shape_cast %45 : vector<1x512xi1> to vector<1x512xi1>
    %68 = vector.broadcast %67 : vector<1x512xi1> to vector<8x512xi1>
    %69 = vector.broadcast %cst_21 : f32 to vector<8x512xf32>
    %70 = arith.select %68, %66, %69 : vector<8x512xi1>, vector<8x512xf32>
    %c510_i32 = arith.constant 510 : i32
    %71 = tpu.dynamic_rotate %55 by %c510_i32 dim 1 : vector<8x512xf32>, i32 -> vector<8x512xf32>
    %cst_22 = arith.constant 0.000000e+00 : f32
    %72 = vector.shape_cast %54 : vector<1x512xi1> to vector<1x512xi1>
    %73 = vector.broadcast %72 : vector<1x512xi1> to vector<8x512xi1>
    %74 = vector.broadcast %cst_22 : f32 to vector<8x512xf32>
    %75 = arith.select %73, %71, %74 : vector<8x512xi1>, vector<8x512xf32>
    %76 = tpu.concatenate %60, %65, %55, %70, %75 in 0 : vector<8x512xf32>, vector<8x512xf32>, vector<8x512xf32>, vector<8x512xf32>, vector<8x512xf32> -> vector<40x512xf32>
    %77 = vector.extract_strided_slice %17 {offsets = [0, 512], sizes = [8, 512], strides = [1, 1]} : vector<8x1024xf32> to vector<8x512xf32>
    %c2_i32_23 = arith.constant 2 : i32
    %78 = tpu.dynamic_rotate %77 by %c2_i32_23 dim 1 : vector<8x512xf32>, i32 -> vector<8x512xf32>
    %cst_24 = arith.constant 0.000000e+00 : f32
    %79 = vector.shape_cast %27 : vector<1x512xi1> to vector<1x512xi1>
    %80 = vector.broadcast %79 : vector<1x512xi1> to vector<8x512xi1>
    %81 = vector.broadcast %cst_24 : f32 to vector<8x512xf32>
    %82 = arith.select %80, %78, %81 : vector<8x512xi1>, vector<8x512xf32>
    %c1_i32_25 = arith.constant 1 : i32
    %83 = tpu.dynamic_rotate %77 by %c1_i32_25 dim 1 : vector<8x512xf32>, i32 -> vector<8x512xf32>
    %cst_26 = arith.constant 0.000000e+00 : f32
    %84 = vector.shape_cast %36 : vector<1x512xi1> to vector<1x512xi1>
    %85 = vector.broadcast %84 : vector<1x512xi1> to vector<8x512xi1>
    %86 = vector.broadcast %cst_26 : f32 to vector<8x512xf32>
    %87 = arith.select %85, %83, %86 : vector<8x512xi1>, vector<8x512xf32>
    %c511_i32_27 = arith.constant 511 : i32
    %88 = tpu.dynamic_rotate %77 by %c511_i32_27 dim 1 : vector<8x512xf32>, i32 -> vector<8x512xf32>
    %cst_28 = arith.constant 0.000000e+00 : f32
    %89 = vector.shape_cast %45 : vector<1x512xi1> to vector<1x512xi1>
    %90 = vector.broadcast %89 : vector<1x512xi1> to vector<8x512xi1>
    %91 = vector.broadcast %cst_28 : f32 to vector<8x512xf32>
    %92 = arith.select %90, %88, %91 : vector<8x512xi1>, vector<8x512xf32>
    %c510_i32_29 = arith.constant 510 : i32
    %93 = tpu.dynamic_rotate %77 by %c510_i32_29 dim 1 : vector<8x512xf32>, i32 -> vector<8x512xf32>
    %cst_30 = arith.constant 0.000000e+00 : f32
    %94 = vector.shape_cast %54 : vector<1x512xi1> to vector<1x512xi1>
    %95 = vector.broadcast %94 : vector<1x512xi1> to vector<8x512xi1>
    %96 = vector.broadcast %cst_30 : f32 to vector<8x512xf32>
    %97 = arith.select %95, %93, %96 : vector<8x512xi1>, vector<8x512xf32>
    %98 = tpu.concatenate %82, %87, %77, %92, %97 in 0 : vector<8x512xf32>, vector<8x512xf32>, vector<8x512xf32>, vector<8x512xf32>, vector<8x512xf32> -> vector<40x512xf32>
    %99 = tpu.concatenate %76, %98 in 1 : vector<40x512xf32>, vector<40x512xf32> -> vector<40x1024xf32>
    %c0_31 = arith.constant 0 : index
    %c0_32 = arith.constant 0 : index
    %100 = vector.load %arg3[%c0_31, %c0_32] : memref<32x40xf32, #tpu.memory_space<vmem>>, vector<32x40xf32>
    %cst_33 = arith.constant dense<0.000000e+00> : vector<32x1024xf32>
    %101 = tpu.matmul %100, %99, %cst_33 {dimension_numbers = #tpu.dot_dimension_numbers<[1], [0], [0], [1], [0, 0, 1, 1], [], []>} : vector<32x40xf32>, vector<40x1024xf32>, vector<32x1024xf32> -> vector<32x1024xf32>
    %c0_34 = arith.constant 0 : index
    %c0_35 = arith.constant 0 : index
    %102 = vector.load %arg4[%c0_34, %c0_35] : memref<32x1xf32, #tpu.memory_space<vmem>>, vector<32x1xf32>
    %103 = vector.broadcast %102 : vector<32x1xf32> to vector<32x1024xf32>
    %104 = arith.addf %101, %103 : vector<32x1024xf32>
    %cst_36 = arith.constant 0.000000e+00 : f32
    %105 = vector.broadcast %cst_36 : f32 to vector<32x1024xf32>
    %106 = arith.maximumf %104, %105 : vector<32x1024xf32>
    %c1_i32_37 = arith.constant 1 : i32
    %107 = vector.broadcast %c1_i32_37 : i32 to vector<1x512xi32>
    %108 = arith.addi %18, %107 : vector<1x512xi32>
    %c0_i32_38 = arith.constant 0 : i32
    %109 = vector.broadcast %c0_i32_38 : i32 to vector<1x512xi32>
    %110 = arith.cmpi sge, %108, %109 : vector<1x512xi32>
    %c1_i32_39 = arith.constant 1 : i32
    %111 = vector.broadcast %c1_i32_39 : i32 to vector<1x512xi32>
    %112 = arith.addi %18, %111 : vector<1x512xi32>
    %c512_i32_40 = arith.constant 512 : i32
    %113 = vector.broadcast %c512_i32_40 : i32 to vector<1x512xi32>
    %114 = arith.cmpi slt, %112, %113 : vector<1x512xi32>
    %115 = arith.andi %110, %114 : vector<1x512xi1>
    %c2_i32_41 = arith.constant 2 : i32
    %116 = vector.broadcast %c2_i32_41 : i32 to vector<1x512xi32>
    %117 = arith.addi %18, %116 : vector<1x512xi32>
    %c0_i32_42 = arith.constant 0 : i32
    %118 = vector.broadcast %c0_i32_42 : i32 to vector<1x512xi32>
    %119 = arith.cmpi sge, %117, %118 : vector<1x512xi32>
    %c2_i32_43 = arith.constant 2 : i32
    %120 = vector.broadcast %c2_i32_43 : i32 to vector<1x512xi32>
    %121 = arith.addi %18, %120 : vector<1x512xi32>
    %c512_i32_44 = arith.constant 512 : i32
    %122 = vector.broadcast %c512_i32_44 : i32 to vector<1x512xi32>
    %123 = arith.cmpi slt, %121, %122 : vector<1x512xi32>
    %124 = arith.andi %119, %123 : vector<1x512xi1>
    %125 = vector.extract_strided_slice %106 {offsets = [0, 0], sizes = [32, 512], strides = [1, 1]} : vector<32x1024xf32> to vector<32x512xf32>
    %c511_i32_45 = arith.constant 511 : i32
    %126 = tpu.dynamic_rotate %125 by %c511_i32_45 dim 1 : vector<32x512xf32>, i32 -> vector<32x512xf32>
    %cst_46 = arith.constant 0.000000e+00 : f32
    %127 = vector.shape_cast %115 : vector<1x512xi1> to vector<1x512xi1>
    %128 = vector.broadcast %127 : vector<1x512xi1> to vector<32x512xi1>
    %129 = vector.broadcast %cst_46 : f32 to vector<32x512xf32>
    %130 = arith.select %128, %126, %129 : vector<32x512xi1>, vector<32x512xf32>
    %c510_i32_47 = arith.constant 510 : i32
    %131 = tpu.dynamic_rotate %125 by %c510_i32_47 dim 1 : vector<32x512xf32>, i32 -> vector<32x512xf32>
    %cst_48 = arith.constant 0.000000e+00 : f32
    %132 = vector.shape_cast %124 : vector<1x512xi1> to vector<1x512xi1>
    %133 = vector.broadcast %132 : vector<1x512xi1> to vector<32x512xi1>
    %134 = vector.broadcast %cst_48 : f32 to vector<32x512xf32>
    %135 = arith.select %133, %131, %134 : vector<32x512xi1>, vector<32x512xf32>
    %136 = tpu.concatenate %125, %130, %135 in 0 : vector<32x512xf32>, vector<32x512xf32>, vector<32x512xf32> -> vector<96x512xf32>
    %137 = vector.extract_strided_slice %106 {offsets = [0, 512], sizes = [32, 512], strides = [1, 1]} : vector<32x1024xf32> to vector<32x512xf32>
    %c511_i32_49 = arith.constant 511 : i32
    %138 = tpu.dynamic_rotate %137 by %c511_i32_49 dim 1 : vector<32x512xf32>, i32 -> vector<32x512xf32>
    %cst_50 = arith.constant 0.000000e+00 : f32
    %139 = vector.shape_cast %115 : vector<1x512xi1> to vector<1x512xi1>
    %140 = vector.broadcast %139 : vector<1x512xi1> to vector<32x512xi1>
    %141 = vector.broadcast %cst_50 : f32 to vector<32x512xf32>
    %142 = arith.select %140, %138, %141 : vector<32x512xi1>, vector<32x512xf32>
    %c510_i32_51 = arith.constant 510 : i32
    %143 = tpu.dynamic_rotate %137 by %c510_i32_51 dim 1 : vector<32x512xf32>, i32 -> vector<32x512xf32>
    %cst_52 = arith.constant 0.000000e+00 : f32
    %144 = vector.shape_cast %124 : vector<1x512xi1> to vector<1x512xi1>
    %145 = vector.broadcast %144 : vector<1x512xi1> to vector<32x512xi1>
    %146 = vector.broadcast %cst_52 : f32 to vector<32x512xf32>
    %147 = arith.select %145, %143, %146 : vector<32x512xi1>, vector<32x512xf32>
    %148 = tpu.concatenate %137, %142, %147 in 0 : vector<32x512xf32>, vector<32x512xf32>, vector<32x512xf32> -> vector<96x512xf32>
    %149 = tpu.concatenate %136, %148 in 1 : vector<96x512xf32>, vector<96x512xf32> -> vector<96x1024xf32>
    %c0_53 = arith.constant 0 : index
    %c0_54 = arith.constant 0 : index
    %150 = vector.load %arg5[%c0_53, %c0_54] : memref<32x96xf32, #tpu.memory_space<vmem>>, vector<32x96xf32>
    %cst_55 = arith.constant dense<0.000000e+00> : vector<32x1024xf32>
    %151 = tpu.matmul %150, %149, %cst_55 {dimension_numbers = #tpu.dot_dimension_numbers<[1], [0], [0], [1], [0, 0, 1, 1], [], []>} : vector<32x96xf32>, vector<96x1024xf32>, vector<32x1024xf32> -> vector<32x1024xf32>
    %c0_56 = arith.constant 0 : index
    %c0_57 = arith.constant 0 : index
    %152 = vector.load %arg6[%c0_56, %c0_57] : memref<32x1xf32, #tpu.memory_space<vmem>>, vector<32x1xf32>
    %153 = vector.broadcast %152 : vector<32x1xf32> to vector<32x1024xf32>
    %154 = arith.addf %151, %153 : vector<32x1024xf32>
    %cst_58 = arith.constant 0.000000e+00 : f32
    %155 = vector.broadcast %cst_58 : f32 to vector<32x1024xf32>
    %156 = arith.maximumf %154, %155 : vector<32x1024xf32>
    %c0_59 = arith.constant 0 : index
    %c0_60 = arith.constant 0 : index
    %157 = vector.load %arg7[%c0_59, %c0_60] : memref<8x32xf32, #tpu.memory_space<vmem>>, vector<8x32xf32>
    %cst_61 = arith.constant dense<0.000000e+00> : vector<8x1024xf32>
    %158 = tpu.matmul %157, %156, %cst_61 {dimension_numbers = #tpu.dot_dimension_numbers<[1], [0], [0], [1], [0, 0, 1, 1], [], []>} : vector<8x32xf32>, vector<32x1024xf32>, vector<8x1024xf32> -> vector<8x1024xf32>
    %159 = vector.extract_strided_slice %158 {offsets = [0, 0], sizes = [1, 1024], strides = [1, 1]} : vector<8x1024xf32> to vector<1x1024xf32>
    %c0_62 = arith.constant 0 : index
    %c0_63 = arith.constant 0 : index
    %160 = vector.load %arg8[%c0_62, %c0_63] : memref<1x1xf32, #tpu.memory_space<vmem>>, vector<1x1xf32>
    %161 = vector.broadcast %160 : vector<1x1xf32> to vector<1x1024xf32>
    %162 = arith.addf %159, %161 : vector<1x1024xf32>
    %c0_64 = arith.constant 0 : index
    %c0_65 = arith.constant 0 : index
    %c0_66 = arith.constant 0 : index
    %163 = vector.load %arg9[%c0_64, %c0_65, %c0_66] : memref<1x1x1024xf32, #tpu.memory_space<vmem>>, vector<1x1x1024xf32>
    %164 = vector.shape_cast %163 : vector<1x1x1024xf32> to vector<1x1024xf32>
    %165 = vector.shape_cast %162 : vector<1x1024xf32> to vector<1x1x1024xf32>
    tpu.vector_store %arg9[%c0_64, %c0_65, %c0_66], %165 {strides = array<i32>} : memref<1x1x1024xf32, #tpu.memory_space<vmem>>, vector<1x1x1024xf32>,
    return
  }
  func.func @transform_0(%arg0: i32) -> (i32, i32, i32) {
    %c0_i32 = arith.constant 0 : i32
    %c0_i32_0 = arith.constant 0 : i32
    %c0_i32_1 = arith.constant 0 : i32
    return %arg0, %c0_i32, %c0_i32_0 : i32, i32, i32
  }
  func.func @transform_1(%arg0: i32) -> (i32, i32) {
    %c0_i32 = arith.constant 0 : i32
    %c0_i32_0 = arith.constant 0 : i32
    %c0_i32_1 = arith.constant 0 : i32
    return %c0_i32, %c0_i32_0 : i32, i32
  }
  func.func @transform_2(%arg0: i32) -> (i32, i32) {
    %c0_i32 = arith.constant 0 : i32
    %c0_i32_0 = arith.constant 0 : i32
    %c0_i32_1 = arith.constant 0 : i32
    return %c0_i32, %c0_i32_0 : i32, i32
  }
  func.func @transform_3(%arg0: i32) -> (i32, i32) {
    %c0_i32 = arith.constant 0 : i32
    %c0_i32_0 = arith.constant 0 : i32
    %c0_i32_1 = arith.constant 0 : i32
    return %c0_i32, %c0_i32_0 : i32, i32
  }
  func.func @transform_4(%arg0: i32) -> (i32, i32) {
    %c0_i32 = arith.constant 0 : i32
    %c0_i32_0 = arith.constant 0 : i32
    %c0_i32_1 = arith.constant 0 : i32
    return %c0_i32, %c0_i32_0 : i32, i32
  }
  func.func @transform_5(%arg0: i32) -> (i32, i32) {
    %c0_i32 = arith.constant 0 : i32
    %c0_i32_0 = arith.constant 0 : i32
    %c0_i32_1 = arith.constant 0 : i32
    return %c0_i32, %c0_i32_0 : i32, i32
  }
  func.func @transform_6(%arg0: i32) -> (i32, i32) {
    %c0_i32 = arith.constant 0 : i32
    %c0_i32_0 = arith.constant 0 : i32
    %c0_i32_1 = arith.constant 0 : i32
    return %c0_i32, %c0_i32_0 : i32, i32
  }
  func.func @transform_7(%arg0: i32) -> (i32, i32) {
    %c0_i32 = arith.constant 0 : i32
    %c0_i32_0 = arith.constant 0 : i32
    %c0_i32_1 = arith.constant 0 : i32
    return %c0_i32, %c0_i32_0 : i32, i32
  }
  func.func @transform_8(%arg0: i32) -> (i32, i32, i32) {
    %c0_i32 = arith.constant 0 : i32
    %c0_i32_0 = arith.constant 0 : i32
    %c0_i32_1 = arith.constant 0 : i32
    return %arg0, %c0_i32, %c0_i32_0 : i32, i32, i32
  }
}

</mosaic_0001>

<llo_original>
// kernel: tpu_custom_call.1
$region0: #{tpu_custom_call.1}
  #allocation0 [shape = 'u32[]', space=smem, size = 0x4, offset = 0x4, fixed_abs, tag = 'smem constant byte address 0x4 - core index']
  #allocation1 [shape = 'u32[72,128]{1,0:T(1,128)}', space=vmem, size = 0x9000, scoped, tag = 'internal scratch']
  #allocation2 [shape = 'f32[1,1]{1,0:T(1,128)S(1)}', space=vmem, size = 0x200, scoped, tag = 'scoped memory for tpu_custom_call.1']
  %s0 = inlined_call_operand.hbm [shape: s32[2,2,512], index: 0, kind: input, shape index: {}]
  %s1 = inlined_call_operand.hbm [shape: f32[8,64], index: 1, kind: input, shape index: {}]
  %s2 = inlined_call_operand.vmem [shape: f32[32,40], index: 2, kind: input, shape index: {}]
  %s3 = inlined_call_operand.vmem [shape: f32[32,1], index: 3, kind: input, shape index: {}]
  %s4 = inlined_call_operand.vmem [shape: f32[32,96], index: 4, kind: input, shape index: {}]
  %s5 = inlined_call_operand.vmem [shape: f32[32,1], index: 5, kind: input, shape index: {}]
  %s6 = inlined_call_operand.hbm [shape: f32[8,32], index: 6, kind: input, shape index: {}]
  %s7 = inlined_call_operand.<no memory space> [shape: f32[1,1], index: 7, kind: input, shape index: {}]
  %s8 = inlined_call_operand.hbm [shape: f32[2,1,1024], index: 8, kind: output, shape index: {}]
  %s9 = sld [smem:[#allocation0]]
  $region77: #{tpu_custom_call.1} parent=0
    _
  %s11 = ssub.s32 1, %s9
  %s12 = scalar_select 0, %s11, %s9
  %v13 = vstv %s7
  %14 = vst [vmem:[#allocation2] sm:$0x1] %v13
  $region1: #{tpu_custom_call.1} parent=0
    #allocation3 [shape = 'u8[8192]{0}', space=vmem, size = 0x2000, scoped, tag = 'input window, operand 0']
    #allocation4 [shape = 's32[2]{0}', space=sflag, size = 0x8, scoped, tag = 'scoped memory for tpu_custom_call.1']
    #allocation5 [shape = 's32[2]{0}', space=sflag, size = 0x8, scoped, tag = 'scoped memory for tpu_custom_call.1']
    #allocation6 [shape = 'u8[4096]{0}', space=vmem, size = 0x1000, scoped, tag = 'input window, operand 1, single buffered']
    #allocation7 [shape = 's32[1]{0}', space=sflag, size = 0x4, scoped, tag = 'scoped memory for tpu_custom_call.1']
    #allocation8 [shape = 'u8[4096]{0}', space=vmem, size = 0x1000, scoped, tag = 'input window, operand 6, single buffered']
    #allocation9 [shape = 'u8[8192]{0}', space=vmem, size = 0x2000, scoped, tag = 'output window, operand 0']
    %15 = vsyncpa [#allocation4], 0
    %s16 = scalar_lea.sflag [#allocation4], 1
    %17 = vsyncpa %s16, 0
    %18 = vsyncpa [#allocation7], 0
    %19 = vsyncpa [#allocation5], 0
    %s20 = scalar_lea.sflag [#allocation5], 1
    %21 = vsyncpa %s20, 0
    loop: start=0, step=1, limit=4
    $region2: #{tpu_custom_call.1} parent=1 // loop_pre_header
      _
    $region3: #{tpu_custom_call.1} parent=1 // loop_header
      %s23 = sphi 0, %s27
      %p24 = scmp.ge.s32.totalorder %s23, 4
      %s33 = sphi 0, %s35
      %s36 = sphi 0, %s33
      %s37 = sphi 0, %s36
      %s53 = sphi 0, %s37
      %s57 = sphi 0, %s57
      %s59 = sphi 0, %s57
      %s60 = sphi 0, %s59
      %s74 = sphi 0, %s60
      %s78 = sphi 0, %s78
      %s80 = sphi 0, %s78
      %s81 = sphi 0, %s80
      %s95 = sphi 0, %s81
      %s99 = sphi 0, %s99
      %s101 = sphi 0, %s99
      %s102 = sphi 0, %s101
      %s116 = sphi 0, %s102
      %s120 = sphi 0, %s120
      %s122 = sphi 0, %s120
      %s123 = sphi 0, %s122
      %s137 = sphi 0, %s123
      %s141 = sphi 0, %s141
      %s143 = sphi 0, %s141
      %s144 = sphi 0, %s143
      %s158 = sphi 0, %s144
      %s162 = sphi 0, %s162
      %s164 = sphi 0, %s162
      %s165 = sphi 0, %s164
      %s179 = sphi 0, %s165
      %s183 = sphi 0, %s183
      %s185 = sphi 0, %s183
      %s186 = sphi 0, %s185
      %s200 = sphi 0, %s186
      %s206 = sphi 0, %s208
      %s209 = sphi 0, %s206
      %s210 = sphi 0, %s209
      %s226 = sphi 0, %s210
    $region4: #{tpu_custom_call.1} parent=1 // loop_header_branch
      %26 = sbr.rel (%p24) target = $region8
    $region5: #{tpu_custom_call.1} parent=1 // loop_body
      %s28 = ssub.s32 %s23, 1
      %s29 = ssub.s32 %s23, 2
      %s30 = sadd.s32 %s23, 1
      %s31 = ssub.s32 %s23, %s30
      %p32 = scmp.eq.s32.totalorder %s31, 0
      %s34 = sadd.s32 %s33, 1
      %s35 = scalar_select %p32, %s33, %s34
      %p38 = pneg %p32
      %p39 = scmp.eq.s32.totalorder %s23, 1
      %p40 = por %p38, %p39
      %p41 = scmp.ne.s32.totalorder %s33, %s36
      %p42 = scmp.eq.s32.totalorder %s23, 0
      %p43 = por %p41, %p42
      %p44 = scmp.ne.s32.totalorder %s33, %s36
      %p45 = scmp.eq.s32.totalorder %s28, 1
      %p46 = por %p44, %p45
      %p47 = scmp.ne.s32.totalorder %s36, %s37
      %p48 = scmp.eq.s32.totalorder %s28, 0
      %p49 = por %p47, %p48
      %p50 = scmp.ne.s32.totalorder %s36, %s37
      %p51 = scmp.eq.s32.totalorder %s29, 1
      %p52 = por %p50, %p51
      %p54 = scmp.ne.s32.totalorder %s37, %s53
      %p55 = scmp.eq.s32.totalorder %s29, 0
      %p56 = por %p54, %p55
      %s58 = sadd.s32 %s57, 1
      %p61 = scmp.eq.s32.totalorder %s23, 1
      %p62 = scmp.ne.s32.totalorder %s57, %s59
      %p63 = scmp.eq.s32.totalorder %s23, 0
      %p64 = por %p62, %p63
      %p65 = scmp.ne.s32.totalorder %s57, %s59
      %p66 = scmp.eq.s32.totalorder %s28, 1
      %p67 = por %p65, %p66
      %p68 = scmp.ne.s32.totalorder %s59, %s60
      %p69 = scmp.eq.s32.totalorder %s28, 0
      %p70 = por %p68, %p69
      %p71 = scmp.ne.s32.totalorder %s59, %s60
      %p72 = scmp.eq.s32.totalorder %s29, 1
      %p73 = por %p71, %p72
      %p75 = scmp.ne.s32.totalorder %s60, %s74
      %p76 = scmp.eq.s32.totalorder %s29, 0
      %p77 = por %p75, %p76
      %s79 = sadd.s32 %s78, 1
      %p82 = scmp.eq.s32.totalorder %s23, 1
      %p83 = scmp.ne.s32.totalorder %s78, %s80
      %p84 = scmp.eq.s32.totalorder %s23, 0
      %p85 = por %p83, %p84
      %p86 = scmp.ne.s32.totalorder %s78, %s80
      %p87 = scmp.eq.s32.totalorder %s28, 1
      %p88 = por %p86, %p87
      %p89 = scmp.ne.s32.totalorder %s80, %s81
      %p90 = scmp.eq.s32.totalorder %s28, 0
      %p91 = por %p89, %p90
      %p92 = scmp.ne.s32.totalorder %s80, %s81
      %p93 = scmp.eq.s32.totalorder %s29, 1
      %p94 = por %p92, %p93
      %p96 = scmp.ne.s32.totalorder %s81, %s95
      %p97 = scmp.eq.s32.totalorder %s29, 0
      %p98 = por %p96, %p97
      %s100 = sadd.s32 %s99, 1
      %p103 = scmp.eq.s32.totalorder %s23, 1
      %p104 = scmp.ne.s32.totalorder %s99, %s101
      %p105 = scmp.eq.s32.totalorder %s23, 0
      %p106 = por %p104, %p105
      %p107 = scmp.ne.s32.totalorder %s99, %s101
      %p108 = scmp.eq.s32.totalorder %s28, 1
      %p109 = por %p107, %p108
      %p110 = scmp.ne.s32.totalorder %s101, %s102
      %p111 = scmp.eq.s32.totalorder %s28, 0
      %p112 = por %p110, %p111
      %p113 = scmp.ne.s32.totalorder %s101, %s102
      %p114 = scmp.eq.s32.totalorder %s29, 1
      %p115 = por %p113, %p114
      %p117 = scmp.ne.s32.totalorder %s102, %s116
      %p118 = scmp.eq.s32.totalorder %s29, 0
      %p119 = por %p117, %p118
      %s121 = sadd.s32 %s120, 1
      %p124 = scmp.eq.s32.totalorder %s23, 1
      %p125 = scmp.ne.s32.totalorder %s120, %s122
      %p126 = scmp.eq.s32.totalorder %s23, 0
      %p127 = por %p125, %p126
      %p128 = scmp.ne.s32.totalorder %s120, %s122
      %p129 = scmp.eq.s32.totalorder %s28, 1
      %p130 = por %p128, %p129
      %p131 = scmp.ne.s32.totalorder %s122, %s123
      %p132 = scmp.eq.s32.totalorder %s28, 0
      %p133 = por %p131, %p132
      %p134 = scmp.ne.s32.totalorder %s122, %s123
      %p135 = scmp.eq.s32.totalorder %s29, 1
      %p136 = por %p134, %p135
      %p138 = scmp.ne.s32.totalorder %s123, %s137
      %p139 = scmp.eq.s32.totalorder %s29, 0
      %p140 = por %p138, %p139
      %s142 = sadd.s32 %s141, 1
      %p145 = scmp.eq.s32.totalorder %s23, 1
      %p146 = scmp.ne.s32.totalorder %s141, %s143
      %p147 = scmp.eq.s32.totalorder %s23, 0
      %p148 = por %p146, %p147
      %p149 = scmp.ne.s32.totalorder %s141, %s143
      %p150 = scmp.eq.s32.totalorder %s28, 1
      %p151 = por %p149, %p150
      %p152 = scmp.ne.s32.totalorder %s143, %s144
      %p153 = scmp.eq.s32.totalorder %s28, 0
      %p154 = por %p152, %p153
      %p155 = scmp.ne.s32.totalorder %s143, %s144
      %p156 = scmp.eq.s32.totalorder %s29, 1
      %p157 = por %p155, %p156
      %p159 = scmp.ne.s32.totalorder %s144, %s158
      %p160 = scmp.eq.s32.totalorder %s29, 0
      %p161 = por %p159, %p160
      %s163 = sadd.s32 %s162, 1
      %p166 = scmp.eq.s32.totalorder %s23, 1
      %p167 = scmp.ne.s32.totalorder %s162, %s164
      %p168 = scmp.eq.s32.totalorder %s23, 0
      %p169 = por %p167, %p168
      %p170 = scmp.ne.s32.totalorder %s162, %s164
      %p171 = scmp.eq.s32.totalorder %s28, 1
      %p172 = por %p170, %p171
      %p173 = scmp.ne.s32.totalorder %s164, %s165
      %p174 = scmp.eq.s32.totalorder %s28, 0
      %p175 = por %p173, %p174
      %p176 = scmp.ne.s32.totalorder %s164, %s165
      %p177 = scmp.eq.s32.totalorder %s29, 1
      %p178 = por %p176, %p177
      %p180 = scmp.ne.s32.totalorder %s165, %s179
      %p181 = scmp.eq.s32.totalorder %s29, 0
      %p182 = por %p180, %p181
      %s184 = sadd.s32 %s183, 1
      %p187 = scmp.eq.s32.totalorder %s23, 1
      %p188 = scmp.ne.s32.totalorder %s183, %s185
      %p189 = scmp.eq.s32.totalorder %s23, 0
      %p190 = por %p188, %p189
      %p191 = scmp.ne.s32.totalorder %s183, %s185
      %p192 = scmp.eq.s32.totalorder %s28, 1
      %p193 = por %p191, %p192
      %p194 = scmp.ne.s32.totalorder %s185, %s186
      %p195 = scmp.eq.s32.totalorder %s28, 0
      %p196 = por %p194, %p195
      %p197 = scmp.ne.s32.totalorder %s185, %s186
      %p198 = scmp.eq.s32.totalorder %s29, 1
      %p199 = por %p197, %p198
      %p201 = scmp.ne.s32.totalorder %s186, %s200
      %p202 = scmp.eq.s32.totalorder %s29, 0
      %p203 = por %p201, %p202
      %s204 = ssub.s32 %s23, %s30
      %p205 = scmp.eq.s32.totalorder %s204, 0
      %s207 = sadd.s32 %s206, 1
      %s208 = scalar_select %p205, %s206, %s207
      %p211 = pneg %p205
      %p212 = scmp.eq.s32.totalorder %s23, 1
      %p213 = por %p211, %p212
      %p214 = scmp.ne.s32.totalorder %s206, %s209
      %p215 = scmp.eq.s32.totalorder %s23, 0
      %p216 = por %p214, %p215
      %p217 = scmp.ne.s32.totalorder %s206, %s209
      %p218 = scmp.eq.s32.totalorder %s28, 1
      %p219 = por %p217, %p218
      %p220 = scmp.ne.s32.totalorder %s209, %s210
      %p221 = scmp.eq.s32.totalorder %s28, 0
      %p222 = por %p220, %p221
      %p223 = scmp.ne.s32.totalorder %s209, %s210
      %p224 = scmp.eq.s32.totalorder %s29, 1
      %p225 = por %p223, %p224
      %p227 = scmp.ne.s32.totalorder %s210, %s226
      %p228 = scmp.eq.s32.totalorder %s29, 0
      %p229 = por %p227, %p228
      %p230 = scmp.le.s32.totalorder 1, %s23
      %p231 = scmp.lt.s32.totalorder %s23, 3
      %p232 = pnand %p230, %p231
      %p233 = pneg %p232
      // Predicated region
      $region9: #{tpu_custom_call.1} parent=5 // pred_check
        _
      $region10: #{tpu_custom_call.1} parent=5 // pred_check_branch
        %235 = sbr.rel (%p232) target = $region12
      $region11: #{tpu_custom_call.1} parent=5 // pred_region
        %s236 = ssub.s32 %s23, 1
        // Predicated region
        $region13: #{tpu_custom_call.1} parent=11 // pred_check
          %p237 = pneg %p70
        $region14: #{tpu_custom_call.1} parent=11 // pred_check_branch
          %239 = sbr.rel (%p237) target = $region16
        $region15: #{tpu_custom_call.1} parent=11 // pred_region
          %241 = vsyncadd [#allocation7], 0
          %s243 = sshll.u32 %s1, 4
          %s244 = int_to_ptr.hbm [resolvable:$true] %s243
          %s245 = sshll.u32 [#allocation6], 4
          %s246 = int_to_ptr.vmem [resolvable:$true] %s245
          %248 = dma.hbm_to_vmem [thread:$0]  %s244, 128, %s246, [#allocation7]
        $region16: #{tpu_custom_call.1} parent=11 // pred_fallthru
          _
        // Predicated region
        $region17: #{tpu_custom_call.1} parent=11 // pred_check
          %p249 = pneg %p91
        $region18: #{tpu_custom_call.1} parent=11 // pred_check_branch
          %251 = sbr.rel (%p249) target = $region20
        $region19: #{tpu_custom_call.1} parent=11 // pred_region
          _
        $region20: #{tpu_custom_call.1} parent=11 // pred_fallthru
          _
        // Predicated region
        $region21: #{tpu_custom_call.1} parent=11 // pred_check
          %p252 = pneg %p112
        $region22: #{tpu_custom_call.1} parent=11 // pred_check_branch
          %254 = sbr.rel (%p252) target = $region24
        $region23: #{tpu_custom_call.1} parent=11 // pred_region
          _
        $region24: #{tpu_custom_call.1} parent=11 // pred_fallthru
          _
        // Predicated region
        $region25: #{tpu_custom_call.1} parent=11 // pred_check
          %p255 = pneg %p133
        $region26: #{tpu_custom_call.1} parent=11 // pred_check_branch
          %257 = sbr.rel (%p255) target = $region28
        $region27: #{tpu_custom_call.1} parent=11 // pred_region
          _
        $region28: #{tpu_custom_call.1} parent=11 // pred_fallthru
          _
        // Predicated region
        $region29: #{tpu_custom_call.1} parent=11 // pred_check
          %p258 = pneg %p154
        $region30: #{tpu_custom_call.1} parent=11 // pred_check_branch
          %260 = sbr.rel (%p258) target = $region32
        $region31: #{tpu_custom_call.1} parent=11 // pred_region
          _
        $region32: #{tpu_custom_call.1} parent=11 // pred_fallthru
          _
        // Predicated region
        $region33: #{tpu_custom_call.1} parent=11 // pred_check
          %p261 = pneg %p175
        $region34: #{tpu_custom_call.1} parent=11 // pred_check_branch
          %263 = sbr.rel (%p261) target = $region36
        $region35: #{tpu_custom_call.1} parent=11 // pred_region
          %265 = vsyncadd [#allocation7], 0
          %s267 = sshll.u32 %s6, 4
          %s268 = int_to_ptr.hbm [resolvable:$true] %s267
          %s269 = sshll.u32 [#allocation8], 4
          %s270 = int_to_ptr.vmem [resolvable:$true] %s269
          %272 = dma.hbm_to_vmem [thread:$0]  %s268, 128, %s270, [#allocation7]
        $region36: #{tpu_custom_call.1} parent=11 // pred_fallthru
          _
        // Predicated region
        $region37: #{tpu_custom_call.1} parent=11 // pred_check
          %p273 = pneg %p196
        $region38: #{tpu_custom_call.1} parent=11 // pred_check_branch
          %275 = sbr.rel (%p273) target = $region40
        $region39: #{tpu_custom_call.1} parent=11 // pred_region
          _
        $region40: #{tpu_custom_call.1} parent=11 // pred_fallthru
          _
      $region12: #{tpu_custom_call.1} parent=5 // pred_fallthru
        _
      %p276 = scmp.lt.s32.totalorder %s23, 2
      // Predicated region
      $region41: #{tpu_custom_call.1} parent=5 // pred_check
        %p277 = pneg %p276
      $region42: #{tpu_custom_call.1} parent=5 // pred_check_branch
        %279 = sbr.rel (%p277) target = $region44
      $region43: #{tpu_custom_call.1} parent=5 // pred_region
        // Predicated region
        $region45: #{tpu_custom_call.1} parent=43 // pred_check
          %p280 = pneg %p43
        $region46: #{tpu_custom_call.1} parent=43 // pred_check_branch
          %282 = sbr.rel (%p280) target = $region48
        $region47: #{tpu_custom_call.1} parent=43 // pred_region
          %s283 = sand.u32 %s33, 1
          %s284 = scalar_lea.sflag [#allocation4], %s283
          %s285 = sand.u32 %s33, 1
          %s286 = smul.addr %s285, 8
          %s287 = scalar_lea.vmem [#allocation3], %s286
          %289 = vsyncadd %s284, 0
          %s290 = smul.addr %s23, 4
          %s291 = smul.addr %s290, 2
          %s292 = scalar_lea.hbm %s0, %s291
          %s294 = sshll.u32 %s292, 4
          %s295 = int_to_ptr.hbm [resolvable:$true] %s294
          %s296 = sshll.u32 %s287, 4
          %s297 = int_to_ptr.vmem [resolvable:$true] %s296
          %299 = dma.hbm_to_vmem [thread:$0]  %s295, 128, %s297, %s284
        $region48: #{tpu_custom_call.1} parent=43 // pred_fallthru
          _
      $region44: #{tpu_custom_call.1} parent=5 // pred_fallthru
        _
      %p300 = scmp.le.s32.totalorder 1, %s23
      %p301 = scmp.lt.s32.totalorder %s23, 3
      %p302 = pnand %p300, %p301
      %p303 = pneg %p302
      // Predicated region
      $region49: #{tpu_custom_call.1} parent=5 // pred_check
        _
      $region50: #{tpu_custom_call.1} parent=5 // pred_check_branch
        %305 = sbr.rel (%p302) target = $region52
      $region51: #{tpu_custom_call.1} parent=5 // pred_region
        %s306 = ssub.s32 %s23, 1
        %s307 = sand.u32 %s36, 1
        %s308 = scalar_lea.sflag [#allocation4], %s307
        %s309 = sand.u32 %s36, 1
        %s310 = smul.addr %s309, 8
        %s311 = scalar_lea.vmem [#allocation3], %s310
        // Predicated region
        $region53: #{tpu_custom_call.1} parent=51 // pred_check
          %p312 = pneg %p49
        $region54: #{tpu_custom_call.1} parent=51 // pred_check_branch
          %314 = sbr.rel (%p312) target = $region56
        $region55: #{tpu_custom_call.1} parent=51 // pred_region
          %316 = dma.done %s308, 128
        $region56: #{tpu_custom_call.1} parent=51 // pred_fallthru
          _
        // Predicated region
        $region57: #{tpu_custom_call.1} parent=51 // pred_check
          %p317 = pneg %p70
        $region58: #{tpu_custom_call.1} parent=51 // pred_check_branch
          %319 = sbr.rel (%p317) target = $region60
        $region59: #{tpu_custom_call.1} parent=51 // pred_region
          %321 = dma.done [#allocation7], 128
        $region60: #{tpu_custom_call.1} parent=51 // pred_fallthru
          _
        // Predicated region
        $region61: #{tpu_custom_call.1} parent=51 // pred_check
          %p322 = pneg %p175
        $region62: #{tpu_custom_call.1} parent=51 // pred_check_branch
          %324 = sbr.rel (%p322) target = $region64
        $region63: #{tpu_custom_call.1} parent=51 // pred_region
          %326 = dma.done [#allocation7], 128
        $region64: #{tpu_custom_call.1} parent=51 // pred_fallthru
          _
        %s327 = sand.u32 %s36, 1
        %s328 = scalar_lea.sflag [#allocation4], %s327
        %s329 = sand.u32 %s36, 1
        %s330 = smul.addr %s329, 8
        %s331 = scalar_lea.vmem [#allocation3], %s330
        %p332 = pneg %p49
        %p333 = pneg %p46
        %p334 = pneg %p70
        %p335 = pneg %p67
        %p336 = pneg %p91
        %p337 = pneg %p88
        %p338 = pneg %p112
        %p339 = pneg %p109
        %p340 = pneg %p133
        %p341 = pneg %p130
        %p342 = pneg %p154
        %p343 = pneg %p151
        %p344 = pneg %p175
        %p345 = pneg %p172
        %p346 = pneg %p196
        %p347 = pneg %p193
        %p348 = pneg %p222
        %p349 = pneg %p219
        %s350 = sand.u32 %s209, 1
        %s351 = scalar_lea.sflag [#allocation5], %s350
        %s352 = sand.u32 %s209, 1
        %s353 = smul.addr %s352, 8
        %s354 = scalar_lea.vmem [#allocation9], %s353
        %v355 = vld [vmem:[%s311] sm:$0xff]
        %v356 = vlaneseq
        %v357 = vshrl.u32 %v356, 7
        %v358 = vadd.s32 %v357, 8
        %v359 = vadd.s32 %v357, 16
        %v360 = vadd.s32 %v357, 24
        %v361 = vadd.s32 %v357, 32
        %v362 = vadd.s32 %v357, 40
        %v363 = vadd.s32 %v357, 48
        %v364 = vadd.s32 %v357, 56
        %v365 = vperm.slane %v355, 0
        %v366 = vperm.slane %v355, 2
        %v367 = vperm.slane %v355, 4
        %v368 = vperm.slane %v355, 6
        %v369 = vperm.slane %v365, 0
        %v370 = vperm.slane %v366, 0
        %v371 = vperm.slane %v367, 0
        %v372 = vperm.slane %v368, 0
        %vm373 = vcmp.eq.s32.totalorder %v357, %v369
        %vm374 = vcmp.eq.s32.totalorder %v357, %v370
        %vm375 = vcmp.eq.s32.totalorder %v357, %v371
        %vm376 = vcmp.eq.s32.totalorder %v357, %v372
        %vm377 = vcmp.eq.s32.totalorder %v358, %v369
        %vm378 = vcmp.eq.s32.totalorder %v358, %v370
        %vm379 = vcmp.eq.s32.totalorder %v358, %v371
        %vm380 = vcmp.eq.s32.totalorder %v358, %v372
        %vm381 = vcmp.eq.s32.totalorder %v359, %v369
        %vm382 = vcmp.eq.s32.totalorder %v359, %v370
        %vm383 = vcmp.eq.s32.totalorder %v359, %v371
        %vm384 = vcmp.eq.s32.totalorder %v359, %v372
        %vm385 = vcmp.eq.s32.totalorder %v360, %v369
        %vm386 = vcmp.eq.s32.totalorder %v360, %v370
        %vm387 = vcmp.eq.s32.totalorder %v360, %v371
        %vm388 = vcmp.eq.s32.totalorder %v360, %v372
        %vm389 = vcmp.eq.s32.totalorder %v361, %v369
        %vm390 = vcmp.eq.s32.totalorder %v361, %v370
        %vm391 = vcmp.eq.s32.totalorder %v361, %v371
        %vm392 = vcmp.eq.s32.totalorder %v361, %v372
        %vm393 = vcmp.eq.s32.totalorder %v362, %v369
        %vm394 = vcmp.eq.s32.totalorder %v362, %v370
        %vm395 = vcmp.eq.s32.totalorder %v362, %v371
        %vm396 = vcmp.eq.s32.totalorder %v362, %v372
        %vm397 = vcmp.eq.s32.totalorder %v363, %v369
        %vm398 = vcmp.eq.s32.totalorder %v363, %v370
        %vm399 = vcmp.eq.s32.totalorder %v363, %v371
        %vm400 = vcmp.eq.s32.totalorder %v363, %v372
        %vm401 = vcmp.eq.s32.totalorder %v364, %v369
        %vm402 = vcmp.eq.s32.totalorder %v364, %v370
        %vm403 = vcmp.eq.s32.totalorder %v364, %v371
        %vm404 = vcmp.eq.s32.totalorder %v364, %v372
        %v405 = vsel %vm373, 1, 0
        %v406 = vsel %vm374, 1, 0
        %v407 = vsel %vm375, 1, 0
        %v408 = vsel %vm376, 1, 0
        %v409 = vsel %vm377, 1, 0
        %v410 = vsel %vm378, 1, 0
        %v411 = vsel %vm379, 1, 0
        %v412 = vsel %vm380, 1, 0
        %v413 = vsel %vm381, 1, 0
        %v414 = vsel %vm382, 1, 0
        %v415 = vsel %vm383, 1, 0
        %v416 = vsel %vm384, 1, 0
        %v417 = vsel %vm385, 1, 0
        %v418 = vsel %vm386, 1, 0
        %v419 = vsel %vm387, 1, 0
        %v420 = vsel %vm388, 1, 0
        %v421 = vsel %vm389, 1, 0
        %v422 = vsel %vm390, 1, 0
        %v423 = vsel %vm391, 1, 0
        %v424 = vsel %vm392, 1, 0
        %v425 = vsel %vm393, 1, 0
        %v426 = vsel %vm394, 1, 0
        %v427 = vsel %vm395, 1, 0
        %v428 = vsel %vm396, 1, 0
        %v429 = vsel %vm397, 1, 0
        %v430 = vsel %vm398, 1, 0
        %v431 = vsel %vm399, 1, 0
        %v432 = vsel %vm400, 1, 0
        %v433 = vsel %vm401, 1, 0
        %v434 = vsel %vm402, 1, 0
        %v435 = vsel %vm403, 1, 0
        %v436 = vsel %vm404, 1, 0
        %v437 = vcvt.s32.f32 %v405
        %v438 = vcvt.s32.f32 %v406
        %v439 = vcvt.s32.f32 %v407
        %v440 = vcvt.s32.f32 %v408
        %v441 = vcvt.s32.f32 %v409
        %v442 = vcvt.s32.f32 %v410
        %v443 = vcvt.s32.f32 %v411
        %v444 = vcvt.s32.f32 %v412
        %v445 = vcvt.s32.f32 %v413
        %v446 = vcvt.s32.f32 %v414
        %v447 = vcvt.s32.f32 %v415
        %v448 = vcvt.s32.f32 %v416
        %v449 = vcvt.s32.f32 %v417
        %v450 = vcvt.s32.f32 %v418
        %v451 = vcvt.s32.f32 %v419
        %v452 = vcvt.s32.f32 %v420
        %v453 = vcvt.s32.f32 %v421
        %v454 = vcvt.s32.f32 %v422
        %v455 = vcvt.s32.f32 %v423
        %v456 = vcvt.s32.f32 %v424
        %v457 = vcvt.s32.f32 %v425
        %v458 = vcvt.s32.f32 %v426
        %v459 = vcvt.s32.f32 %v427
        %v460 = vcvt.s32.f32 %v428
        %v461 = vcvt.s32.f32 %v429
        %v462 = vcvt.s32.f32 %v430
        %v463 = vcvt.s32.f32 %v431
        %v464 = vcvt.s32.f32 %v432
        %v465 = vcvt.s32.f32 %v433
        %v466 = vcvt.s32.f32 %v434
        %v467 = vcvt.s32.f32 %v435
        %v468 = vcvt.s32.f32 %v436
        %v469 = vld [vmem:[#allocation6] sm:$0xff]
        %vm470 = vcmask 523264
        %v472 = vsel %vm470, %v469, 0
        %474 = vmatpush.msra.mxu0 0.0
        %475 = vmatpush.msra.mxu0 0.0
        %476 = vmatpush.msra.mxu0 0.0
        %477 = vmatpush.msra.mxu0 0.0
        %478 = vmatpush.msra.mxu0 0.0
        %479 = vmatpush.msra.mxu0 0.0
        %480 = vmatpush.msra.mxu0 0.0
        %481 = vmatpush.msra.mxu0 0.0
        %482 = vmatpush.msra.mxu0 %v465
        %483 = vmatpush.msra.mxu0 %v461
        %484 = vmatpush.msra.mxu0 %v457
        %485 = vmatpush.msra.mxu0 %v453
        %486 = vmatpush.msra.mxu0 %v449
        %487 = vmatpush.msra.mxu0 %v445
        %488 = vmatpush.msra.mxu0 %v441
        %489 = vmatpush.msra.mxu0 %v437
        %490 = vmatmul.f32.gmra.mxu0 %v472
        %v491 = vpop.f32.mrf.mxu0
        %v492 = vadd.f32 0.0, %v491
        %493 = vdwg.mxu0
        %494 = vmatpush.msra.mxu0 0.0
        %495 = vmatpush.msra.mxu0 0.0
        %496 = vmatpush.msra.mxu0 0.0
        %497 = vmatpush.msra.mxu0 0.0
        %498 = vmatpush.msra.mxu0 0.0
        %499 = vmatpush.msra.mxu0 0.0
        %500 = vmatpush.msra.mxu0 0.0
        %501 = vmatpush.msra.mxu0 0.0
        %502 = vmatpush.msra.mxu0 %v466
        %503 = vmatpush.msra.mxu0 %v462
        %504 = vmatpush.msra.mxu0 %v458
        %505 = vmatpush.msra.mxu0 %v454
        %506 = vmatpush.msra.mxu0 %v450
        %507 = vmatpush.msra.mxu0 %v446
        %508 = vmatpush.msra.mxu0 %v442
        %509 = vmatpush.msra.mxu0 %v438
        %510 = vmatmul.f32.gmra.mxu0 %v472
        %v511 = vpop.f32.mrf.mxu0
        %v512 = vadd.f32 0.0, %v511
        %513 = vdwg.mxu0
        %514 = vmatpush.msra.mxu0 0.0
        %515 = vmatpush.msra.mxu0 0.0
        %516 = vmatpush.msra.mxu0 0.0
        %517 = vmatpush.msra.mxu0 0.0
        %518 = vmatpush.msra.mxu0 0.0
        %519 = vmatpush.msra.mxu0 0.0
        %520 = vmatpush.msra.mxu0 0.0
        %521 = vmatpush.msra.mxu0 0.0
        %522 = vmatpush.msra.mxu0 %v467
        %523 = vmatpush.msra.mxu0 %v463
        %524 = vmatpush.msra.mxu0 %v459
        %525 = vmatpush.msra.mxu0 %v455
        %526 = vmatpush.msra.mxu0 %v451
        %527 = vmatpush.msra.mxu0 %v447
        %528 = vmatpush.msra.mxu0 %v443
        %529 = vmatpush.msra.mxu0 %v439
        %530 = vmatmul.f32.gmra.mxu0 %v472
        %v531 = vpop.f32.mrf.mxu0
        %v532 = vadd.f32 0.0, %v531
        %533 = vdwg.mxu0
        %534 = vmatpush.msra.mxu0 0.0
        %535 = vmatpush.msra.mxu0 0.0
        %536 = vmatpush.msra.mxu0 0.0
        %537 = vmatpush.msra.mxu0 0.0
        %538 = vmatpush.msra.mxu0 0.0
        %539 = vmatpush.msra.mxu0 0.0
        %540 = vmatpush.msra.mxu0 0.0
        %541 = vmatpush.msra.mxu0 0.0
        %542 = vmatpush.msra.mxu0 %v468
        %543 = vmatpush.msra.mxu0 %v464
        %544 = vmatpush.msra.mxu0 %v460
        %545 = vmatpush.msra.mxu0 %v456
        %546 = vmatpush.msra.mxu0 %v452
        %547 = vmatpush.msra.mxu0 %v448
        %548 = vmatpush.msra.mxu0 %v444
        %549 = vmatpush.msra.mxu0 %v440
        %550 = vmatmul.f32.gmra.mxu0 %v472
        %v551 = vpop.f32.mrf.mxu0
        %v552 = vadd.f32 0.0, %v551
        %553 = vdwg.mxu0
        %v554 = vperm.slane %v355, 1
        %v555 = vperm.slane %v355, 3
        %v556 = vperm.slane %v355, 5
        %v557 = vperm.slane %v355, 7
        %v558 = vperm.slane %v554, 1
        %v559 = vperm.slane %v555, 1
        %v560 = vperm.slane %v556, 1
        %v561 = vperm.slane %v557, 1
        %vm562 = vcmp.eq.s32.totalorder %v357, %v558
        %vm563 = vcmp.eq.s32.totalorder %v357, %v559
        %vm564 = vcmp.eq.s32.totalorder %v357, %v560
        %vm565 = vcmp.eq.s32.totalorder %v357, %v561
        %vm566 = vcmp.eq.s32.totalorder %v358, %v558
        %vm567 = vcmp.eq.s32.totalorder %v358, %v559
        %vm568 = vcmp.eq.s32.totalorder %v358, %v560
        %vm569 = vcmp.eq.s32.totalorder %v358, %v561
        %vm570 = vcmp.eq.s32.totalorder %v359, %v558
        %vm571 = vcmp.eq.s32.totalorder %v359, %v559
        %vm572 = vcmp.eq.s32.totalorder %v359, %v560
        %vm573 = vcmp.eq.s32.totalorder %v359, %v561
        %vm574 = vcmp.eq.s32.totalorder %v360, %v558
        %vm575 = vcmp.eq.s32.totalorder %v360, %v559
        %vm576 = vcmp.eq.s32.totalorder %v360, %v560
        %vm577 = vcmp.eq.s32.totalorder %v360, %v561
        %vm578 = vcmp.eq.s32.totalorder %v361, %v558
        %vm579 = vcmp.eq.s32.totalorder %v361, %v559
        %vm580 = vcmp.eq.s32.totalorder %v361, %v560
        %vm581 = vcmp.eq.s32.totalorder %v361, %v561
        %vm582 = vcmp.eq.s32.totalorder %v362, %v558
        %vm583 = vcmp.eq.s32.totalorder %v362, %v559
        %vm584 = vcmp.eq.s32.totalorder %v362, %v560
        %vm585 = vcmp.eq.s32.totalorder %v362, %v561
        %vm586 = vcmp.eq.s32.totalorder %v363, %v558
        %vm587 = vcmp.eq.s32.totalorder %v363, %v559
        %vm588 = vcmp.eq.s32.totalorder %v363, %v560
        %vm589 = vcmp.eq.s32.totalorder %v363, %v561
        %vm590 = vcmp.eq.s32.totalorder %v364, %v558
        %vm591 = vcmp.eq.s32.totalorder %v364, %v559
        %vm592 = vcmp.eq.s32.totalorder %v364, %v560
        %vm593 = vcmp.eq.s32.totalorder %v364, %v561
        %v594 = vsel %vm562, 1, 0
        %v595 = vsel %vm563, 1, 0
        %v596 = vsel %vm564, 1, 0
        %v597 = vsel %vm565, 1, 0
        %v598 = vsel %vm566, 1, 0
        %v599 = vsel %vm567, 1, 0
        %v600 = vsel %vm568, 1, 0
        %v601 = vsel %vm569, 1, 0
        %v602 = vsel %vm570, 1, 0
        %v603 = vsel %vm571, 1, 0
        %v604 = vsel %vm572, 1, 0
        %v605 = vsel %vm573, 1, 0
        %v606 = vsel %vm574, 1, 0
        %v607 = vsel %vm575, 1, 0
        %v608 = vsel %vm576, 1, 0
        %v609 = vsel %vm577, 1, 0
        %v610 = vsel %vm578, 1, 0
        %v611 = vsel %vm579, 1, 0
        %v612 = vsel %vm580, 1, 0
        %v613 = vsel %vm581, 1, 0
        %v614 = vsel %vm582, 1, 0
        %v615 = vsel %vm583, 1, 0
        %v616 = vsel %vm584, 1, 0
        %v617 = vsel %vm585, 1, 0
        %v618 = vsel %vm586, 1, 0
        %v619 = vsel %vm587, 1, 0
        %v620 = vsel %vm588, 1, 0
        %v621 = vsel %vm589, 1, 0
        %v622 = vsel %vm590, 1, 0
        %v623 = vsel %vm591, 1, 0
        %v624 = vsel %vm592, 1, 0
        %v625 = vsel %vm593, 1, 0
        %v626 = vcvt.s32.f32 %v594
        %v627 = vcvt.s32.f32 %v595
        %v628 = vcvt.s32.f32 %v596
        %v629 = vcvt.s32.f32 %v597
        %v630 = vcvt.s32.f32 %v598
        %v631 = vcvt.s32.f32 %v599
        %v632 = vcvt.s32.f32 %v600
        %v633 = vcvt.s32.f32 %v601
        %v634 = vcvt.s32.f32 %v602
        %v635 = vcvt.s32.f32 %v603
        %v636 = vcvt.s32.f32 %v604
        %v637 = vcvt.s32.f32 %v605
        %v638 = vcvt.s32.f32 %v606
        %v639 = vcvt.s32.f32 %v607
        %v640 = vcvt.s32.f32 %v608
        %v641 = vcvt.s32.f32 %v609
        %v642 = vcvt.s32.f32 %v610
        %v643 = vcvt.s32.f32 %v611
        %v644 = vcvt.s32.f32 %v612
        %v645 = vcvt.s32.f32 %v613
        %v646 = vcvt.s32.f32 %v614
        %v647 = vcvt.s32.f32 %v615
        %v648 = vcvt.s32.f32 %v616
        %v649 = vcvt.s32.f32 %v617
        %v650 = vcvt.s32.f32 %v618
        %v651 = vcvt.s32.f32 %v619
        %v652 = vcvt.s32.f32 %v620
        %v653 = vcvt.s32.f32 %v621
        %v654 = vcvt.s32.f32 %v622
        %v655 = vcvt.s32.f32 %v623
        %v656 = vcvt.s32.f32 %v624
        %v657 = vcvt.s32.f32 %v625
        %658 = vmatpush.msra.mxu0 0.0
        %659 = vmatpush.msra.mxu0 0.0
        %660 = vmatpush.msra.mxu0 0.0
        %661 = vmatpush.msra.mxu0 0.0
        %662 = vmatpush.msra.mxu0 0.0
        %663 = vmatpush.msra.mxu0 0.0
        %664 = vmatpush.msra.mxu0 0.0
        %665 = vmatpush.msra.mxu0 0.0
        %666 = vmatpush.msra.mxu0 %v654
        %667 = vmatpush.msra.mxu0 %v650
        %668 = vmatpush.msra.mxu0 %v646
        %669 = vmatpush.msra.mxu0 %v642
        %670 = vmatpush.msra.mxu0 %v638
        %671 = vmatpush.msra.mxu0 %v634
        %672 = vmatpush.msra.mxu0 %v630
        %673 = vmatpush.msra.mxu0 %v626
        %674 = vmatmul.f32.gmra.mxu0 %v472
        %v675 = vpop.f32.mrf.mxu0
        %v676 = vadd.f32 0.0, %v675
        %677 = vdwg.mxu0
        %678 = vmatpush.msra.mxu0 0.0
        %679 = vmatpush.msra.mxu0 0.0
        %680 = vmatpush.msra.mxu0 0.0
        %681 = vmatpush.msra.mxu0 0.0
        %682 = vmatpush.msra.mxu0 0.0
        %683 = vmatpush.msra.mxu0 0.0
        %684 = vmatpush.msra.mxu0 0.0
        %685 = vmatpush.msra.mxu0 0.0
        %686 = vmatpush.msra.mxu0 %v655
        %687 = vmatpush.msra.mxu0 %v651
        %688 = vmatpush.msra.mxu0 %v647
        %689 = vmatpush.msra.mxu0 %v643
        %690 = vmatpush.msra.mxu0 %v639
        %691 = vmatpush.msra.mxu0 %v635
        %692 = vmatpush.msra.mxu0 %v631
        %693 = vmatpush.msra.mxu0 %v627
        %694 = vmatmul.f32.gmra.mxu0 %v472
        %v695 = vpop.f32.mrf.mxu0
        %v696 = vadd.f32 0.0, %v695
        %697 = vdwg.mxu0
        %698 = vmatpush.msra.mxu0 0.0
        %699 = vmatpush.msra.mxu0 0.0
        %700 = vmatpush.msra.mxu0 0.0
        %701 = vmatpush.msra.mxu0 0.0
        %702 = vmatpush.msra.mxu0 0.0
        %703 = vmatpush.msra.mxu0 0.0
        %704 = vmatpush.msra.mxu0 0.0
        %705 = vmatpush.msra.mxu0 0.0
        %706 = vmatpush.msra.mxu0 %v656
        %707 = vmatpush.msra.mxu0 %v652
        %708 = vmatpush.msra.mxu0 %v648
        %709 = vmatpush.msra.mxu0 %v644
        %710 = vmatpush.msra.mxu0 %v640
        %711 = vmatpush.msra.mxu0 %v636
        %712 = vmatpush.msra.mxu0 %v632
        %713 = vmatpush.msra.mxu0 %v628
        %714 = vmatmul.f32.gmra.mxu0 %v472
        %v715 = vpop.f32.mrf.mxu0
        %v716 = vadd.f32 0.0, %v715
        %717 = vdwg.mxu0
        %718 = vmatpush.msra.mxu0 0.0
        %719 = vmatpush.msra.mxu0 0.0
        %720 = vmatpush.msra.mxu0 0.0
        %721 = vmatpush.msra.mxu0 0.0
        %722 = vmatpush.msra.mxu0 0.0
        %723 = vmatpush.msra.mxu0 0.0
        %724 = vmatpush.msra.mxu0 0.0
        %725 = vmatpush.msra.mxu0 0.0
        %726 = vmatpush.msra.mxu0 %v657
        %727 = vmatpush.msra.mxu0 %v653
        %728 = vmatpush.msra.mxu0 %v649
        %729 = vmatpush.msra.mxu0 %v645
        %730 = vmatpush.msra.mxu0 %v641
        %731 = vmatpush.msra.mxu0 %v637
        %732 = vmatpush.msra.mxu0 %v633
        %733 = vmatpush.msra.mxu0 %v629
        %734 = vmatmul.f32.gmra.mxu0 %v472
        %v735 = vpop.f32.mrf.mxu0
        %v736 = vadd.f32 0.0, %v735
        %737 = vdwg.mxu0
        %v738 = vlaneseq
        %v739 = vand.u32 %v738, 127
        %v740 = vadd.s32 %v739, 128
        %v741 = vadd.s32 %v739, 256
        %v742 = vadd.s32 %v739, 384
        %v743 = vadd.s32 %v739, 4294967294
        %v744 = vadd.s32 %v740, 4294967294
        %v745 = vadd.s32 %v741, 4294967294
        %v746 = vadd.s32 %v742, 4294967294
        %vm747 = vcmp.ge.s32.totalorder %v743, 0
        %vm748 = vcmp.ge.s32.totalorder %v744, 0
        %vm749 = vcmp.ge.s32.totalorder %v745, 0
        %vm750 = vcmp.ge.s32.totalorder %v746, 0
        %vm751 = vcmp.lt.s32.totalorder %v743, 512
        %vm752 = vcmp.lt.s32.totalorder %v744, 512
        %vm753 = vcmp.lt.s32.totalorder %v745, 512
        %vm754 = vcmp.lt.s32.totalorder %v746, 512
        %vm755 = vmand %vm747, %vm751
        %vm756 = vmand %vm748, %vm752
        %vm757 = vmand %vm749, %vm753
        %vm758 = vmand %vm750, %vm754
        %v759 = vadd.s32 %v739, 4294967295
        %v760 = vadd.s32 %v740, 4294967295
        %v761 = vadd.s32 %v741, 4294967295
        %v762 = vadd.s32 %v742, 4294967295
        %vm763 = vcmp.ge.s32.totalorder %v759, 0
        %vm764 = vcmp.ge.s32.totalorder %v760, 0
        %vm765 = vcmp.ge.s32.totalorder %v761, 0
        %vm766 = vcmp.ge.s32.totalorder %v762, 0
        %vm767 = vcmp.lt.s32.totalorder %v759, 512
        %vm768 = vcmp.lt.s32.totalorder %v760, 512
        %vm769 = vcmp.lt.s32.totalorder %v761, 512
        %vm770 = vcmp.lt.s32.totalorder %v762, 512
        %vm771 = vmand %vm763, %vm767
        %vm772 = vmand %vm764, %vm768
        %vm773 = vmand %vm765, %vm769
        %vm774 = vmand %vm766, %vm770
        %v775 = vadd.s32 %v739, 1
        %v776 = vadd.s32 %v740, 1
        %v777 = vadd.s32 %v741, 1
        %v778 = vadd.s32 %v742, 1
        %vm779 = vcmp.ge.s32.totalorder %v775, 0
        %vm780 = vcmp.ge.s32.totalorder %v776, 0
        %vm781 = vcmp.ge.s32.totalorder %v777, 0
        %vm782 = vcmp.ge.s32.totalorder %v778, 0
        %vm783 = vcmp.lt.s32.totalorder %v775, 512
        %vm784 = vcmp.lt.s32.totalorder %v776, 512
        %vm785 = vcmp.lt.s32.totalorder %v777, 512
        %vm786 = vcmp.lt.s32.totalorder %v778, 512
        %vm787 = vmand %vm779, %vm783
        %vm788 = vmand %vm780, %vm784
        %vm789 = vmand %vm781, %vm785
        %vm790 = vmand %vm782, %vm786
        %v791 = vadd.s32 %v739, 2
        %v792 = vadd.s32 %v740, 2
        %v793 = vadd.s32 %v741, 2
        %v794 = vadd.s32 %v742, 2
        %vm795 = vcmp.ge.s32.totalorder %v791, 0
        %vm796 = vcmp.ge.s32.totalorder %v792, 0
        %vm797 = vcmp.ge.s32.totalorder %v793, 0
        %vm798 = vcmp.ge.s32.totalorder %v794, 0
        %vm799 = vcmp.lt.s32.totalorder %v791, 512
        %vm800 = vcmp.lt.s32.totalorder %v792, 512
        %vm801 = vcmp.lt.s32.totalorder %v793, 512
        %vm802 = vcmp.lt.s32.totalorder %v794, 512
        %vm803 = vmand %vm795, %vm799
        %vm804 = vmand %vm796, %vm800
        %vm805 = vmand %vm797, %vm801
        %vm806 = vmand %vm798, %vm802
        %807 = vrot.lane.b32.xlu0 %v492, 2
        %v808 = vpop.permute.xlu0 %807
        %809 = vrot.lane.b32.xlu0 %v512, 2
        %v810 = vpop.permute.xlu0 %809
        %811 = vrot.lane.b32.xlu0 %v532, 2
        %v812 = vpop.permute.xlu0 %811
        %813 = vrot.lane.b32.xlu0 %v552, 2
        %v814 = vpop.permute.xlu0 %813
        %vm815 = vcmp.lt.s32.totalorder %v739, 2
        %v816 = vsel %vm815, %v812, %v814
        %v817 = vsel %vm815, %v810, %v812
        %v818 = vsel %vm815, %v808, %v810
        %v819 = vsel %vm815, %v814, %v808
        %v820 = vsel %vm755, 1, 0
        %v821 = vsel %vm756, 1, 0
        %v822 = vsel %vm757, 1, 0
        %v823 = vsel %vm758, 1, 0
        %vm824 = vcmp.eq.s32.totalorder %v820, 1
        %vm825 = vcmp.eq.s32.totalorder %v821, 1
        %vm826 = vcmp.eq.s32.totalorder %v822, 1
        %vm827 = vcmp.eq.s32.totalorder %v823, 1
        %v828 = vsel %vm824, %v819, 0.0
        %v829 = vsel %vm825, %v818, 0.0
        %v830 = vsel %vm826, %v817, 0.0
        %v831 = vsel %vm827, %v816, 0.0
        %832 = vrot.lane.b32.xlu0 %v492, 1
        %v833 = vpop.permute.xlu0 %832
        %834 = vrot.lane.b32.xlu0 %v512, 1
        %v835 = vpop.permute.xlu0 %834
        %836 = vrot.lane.b32.xlu0 %v532, 1
        %v837 = vpop.permute.xlu0 %836
        %838 = vrot.lane.b32.xlu0 %v552, 1
        %v839 = vpop.permute.xlu0 %838
        %vm840 = vcmp.lt.s32.totalorder %v739, 1
        %v841 = vsel %vm840, %v837, %v839
        %v842 = vsel %vm840, %v835, %v837
        %v843 = vsel %vm840, %v833, %v835
        %v844 = vsel %vm840, %v839, %v833
        %v845 = vsel %vm771, 1, 0
        %v846 = vsel %vm772, 1, 0
        %v847 = vsel %vm773, 1, 0
        %v848 = vsel %vm774, 1, 0
        %vm849 = vcmp.eq.s32.totalorder %v845, 1
        %vm850 = vcmp.eq.s32.totalorder %v846, 1
        %vm851 = vcmp.eq.s32.totalorder %v847, 1
        %vm852 = vcmp.eq.s32.totalorder %v848, 1
        %v853 = vsel %vm849, %v844, 0.0
        %v854 = vsel %vm850, %v843, 0.0
        %v855 = vsel %vm851, %v842, 0.0
        %v856 = vsel %vm852, %v841, 0.0
        %857 = vrot.lane.b32.xlu0 %v492, 127
        %v858 = vpop.permute.xlu0 %857
        %859 = vrot.lane.b32.xlu0 %v512, 127
        %v860 = vpop.permute.xlu0 %859
        %861 = vrot.lane.b32.xlu0 %v532, 127
        %v862 = vpop.permute.xlu0 %861
        %863 = vrot.lane.b32.xlu0 %v552, 127
        %v864 = vpop.permute.xlu0 %863
        %vm865 = vcmp.lt.s32.totalorder %v739, 127
        %v866 = vsel %vm865, %v862, %v864
        %v867 = vsel %vm865, %v860, %v862
        %v868 = vsel %vm865, %v858, %v860
        %v869 = vsel %vm865, %v864, %v858
        %v870 = vsel %vm787, 1, 0
        %v871 = vsel %vm788, 1, 0
        %v872 = vsel %vm789, 1, 0
        %v873 = vsel %vm790, 1, 0
        %vm874 = vcmp.eq.s32.totalorder %v870, 1
        %vm875 = vcmp.eq.s32.totalorder %v871, 1
        %vm876 = vcmp.eq.s32.totalorder %v872, 1
        %vm877 = vcmp.eq.s32.totalorder %v873, 1
        %v878 = vsel %vm874, %v868, 0.0
        %v879 = vsel %vm875, %v867, 0.0
        %v880 = vsel %vm876, %v866, 0.0
        %v881 = vsel %vm877, %v869, 0.0
        %882 = vrot.lane.b32.xlu0 %v492, 126
        %v883 = vpop.permute.xlu0 %882
        %884 = vrot.lane.b32.xlu0 %v512, 126
        %v885 = vpop.permute.xlu0 %884
        %886 = vrot.lane.b32.xlu0 %v532, 126
        %v887 = vpop.permute.xlu0 %886
        %888 = vrot.lane.b32.xlu0 %v552, 126
        %v889 = vpop.permute.xlu0 %888
        %vm890 = vcmp.lt.s32.totalorder %v739, 126
        %v891 = vsel %vm890, %v887, %v889
        %v892 = vsel %vm890, %v885, %v887
        %v893 = vsel %vm890, %v883, %v885
        %v894 = vsel %vm890, %v889, %v883
        %v895 = vsel %vm803, 1, 0
        %v896 = vsel %vm804, 1, 0
        %v897 = vsel %vm805, 1, 0
        %v898 = vsel %vm806, 1, 0
        %vm899 = vcmp.eq.s32.totalorder %v895, 1
        %vm900 = vcmp.eq.s32.totalorder %v896, 1
        %vm901 = vcmp.eq.s32.totalorder %v897, 1
        %vm902 = vcmp.eq.s32.totalorder %v898, 1
        %v903 = vsel %vm899, %v893, 0.0
        %v904 = vsel %vm900, %v892, 0.0
        %v905 = vsel %vm901, %v891, 0.0
        %v906 = vsel %vm902, %v894, 0.0
        %907 = vrot.lane.b32.xlu0 %v676, 2
        %v908 = vpop.permute.xlu0 %907
        %909 = vrot.lane.b32.xlu0 %v696, 2
        %v910 = vpop.permute.xlu0 %909
        %911 = vrot.lane.b32.xlu0 %v716, 2
        %v912 = vpop.permute.xlu0 %911
        %913 = vrot.lane.b32.xlu0 %v736, 2
        %v914 = vpop.permute.xlu0 %913
        %v915 = vsel %vm815, %v912, %v914
        %v916 = vsel %vm815, %v910, %v912
        %v917 = vsel %vm815, %v908, %v910
        %v918 = vsel %vm815, %v914, %v908
        %v919 = vsel %vm824, %v918, 0.0
        %v920 = vsel %vm825, %v917, 0.0
        %v921 = vsel %vm826, %v916, 0.0
        %v922 = vsel %vm827, %v915, 0.0
        %923 = vrot.lane.b32.xlu0 %v676, 1
        %v924 = vpop.permute.xlu0 %923
        %925 = vrot.lane.b32.xlu0 %v696, 1
        %v926 = vpop.permute.xlu0 %925
        %927 = vrot.lane.b32.xlu0 %v716, 1
        %v928 = vpop.permute.xlu0 %927
        %929 = vrot.lane.b32.xlu0 %v736, 1
        %v930 = vpop.permute.xlu0 %929
        %v931 = vsel %vm840, %v928, %v930
        %v932 = vsel %vm840, %v926, %v928
        %v933 = vsel %vm840, %v924, %v926
        %v934 = vsel %vm840, %v930, %v924
        %v935 = vsel %vm849, %v934, 0.0
        %v936 = vsel %vm850, %v933, 0.0
        %v937 = vsel %vm851, %v932, 0.0
        %v938 = vsel %vm852, %v931, 0.0
        %939 = vrot.lane.b32.xlu0 %v676, 127
        %v940 = vpop.permute.xlu0 %939
        %941 = vrot.lane.b32.xlu0 %v696, 127
        %v942 = vpop.permute.xlu0 %941
        %943 = vrot.lane.b32.xlu0 %v716, 127
        %v944 = vpop.permute.xlu0 %943
        %945 = vrot.lane.b32.xlu0 %v736, 127
        %v946 = vpop.permute.xlu0 %945
        %v947 = vsel %vm865, %v944, %v946
        %v948 = vsel %vm865, %v942, %v944
        %v949 = vsel %vm865, %v940, %v942
        %v950 = vsel %vm865, %v946, %v940
        %v951 = vsel %vm874, %v949, 0.0
        %v952 = vsel %vm875, %v948, 0.0
        %v953 = vsel %vm876, %v947, 0.0
        %v954 = vsel %vm877, %v950, 0.0
        %955 = vrot.lane.b32.xlu0 %v676, 126
        %v956 = vpop.permute.xlu0 %955
        %957 = vrot.lane.b32.xlu0 %v696, 126
        %v958 = vpop.permute.xlu0 %957
        %959 = vrot.lane.b32.xlu0 %v716, 126
        %v960 = vpop.permute.xlu0 %959
        %961 = vrot.lane.b32.xlu0 %v736, 126
        %v962 = vpop.permute.xlu0 %961
        %v963 = vsel %vm890, %v960, %v962
        %v964 = vsel %vm890, %v958, %v960
        %v965 = vsel %vm890, %v956, %v958
        %v966 = vsel %vm890, %v962, %v956
        %v967 = vsel %vm899, %v965, 0.0
        %v968 = vsel %vm900, %v964, 0.0
        %v969 = vsel %vm901, %v963, 0.0
        %v970 = vsel %vm902, %v966, 0.0
        %v971 = vld [vmem:[%s2] sm:$0xff]
        %v972 = vld [vmem:[%s2 + $0x8] sm:$0xff]
        %v973 = vld [vmem:[%s2 + $0x10] sm:$0xff]
        %v974 = vld [vmem:[%s2 + $0x18] sm:$0xff]
        %v975 = vld [vmem:[%s3] sm:$0xff]
        %v976 = vld [vmem:[%s3 + $0x8] sm:$0xff]
        %v977 = vld [vmem:[%s3 + $0x10] sm:$0xff]
        %v978 = vld [vmem:[%s3 + $0x18] sm:$0xff]
        %980 = vset.pattern.permute.xlu0 0
        %981 = vperm.xlu0 %980, %v975
        %v982 = vpop.permute.xlu0 %981
        %985 = vset.pattern.permute.xlu0 0
        %986 = vperm.xlu0 %985, %v976
        %v987 = vpop.permute.xlu0 %986
        %990 = vset.pattern.permute.xlu0 0
        %991 = vperm.xlu0 %990, %v977
        %v992 = vpop.permute.xlu0 %991
        %995 = vset.pattern.permute.xlu0 0
        %996 = vperm.xlu0 %995, %v978
        %v997 = vpop.permute.xlu0 %996
        %vm999 = vcmask 326656
        %v1001 = vsel %vm999, %v971, 0
        %v1004 = vsel %vm999, %v972, 0
        %v1007 = vsel %vm999, %v973, 0
        %v1010 = vsel %vm999, %v974, 0
        %1012 = vmatpush.msra.mxu0 0.0
        %1013 = vmatpush.msra.mxu0 0.0
        %1014 = vmatpush.msra.mxu0 0.0
        %1015 = vmatpush.msra.mxu0 0.0
        %1016 = vmatpush.msra.mxu0 0.0
        %1017 = vmatpush.msra.mxu0 0.0
        %1018 = vmatpush.msra.mxu0 0.0
        %1019 = vmatpush.msra.mxu0 0.0
        %1020 = vmatpush.msra.mxu0 0.0
        %1021 = vmatpush.msra.mxu0 0.0
        %1022 = vmatpush.msra.mxu0 0.0
        %1023 = vmatpush.msra.mxu0 %v903
        %1024 = vmatpush.msra.mxu0 %v878
        %1025 = vmatpush.msra.mxu0 %v492
        %1026 = vmatpush.msra.mxu0 %v853
        %1027 = vmatpush.msra.mxu0 %v828
        %1028 = vmatmul.f32.gmra.mxu0 %v1001
        %v1029 = vpop.f32.mrf.mxu0
        %v1030 = vadd.f32 %v982, %v1029
        %1031 = vmatmul.f32.gmra.mxu0 %v1004
        %v1032 = vpop.f32.mrf.mxu0
        %v1033 = vadd.f32 %v987, %v1032
        %1034 = vmatmul.f32.gmra.mxu0 %v1007
        %v1035 = vpop.f32.mrf.mxu0
        %v1036 = vadd.f32 %v992, %v1035
        %1037 = vmatmul.f32.gmra.mxu0 %v1010
        %v1038 = vpop.f32.mrf.mxu0
        %v1039 = vadd.f32 %v997, %v1038
        %1040 = vdwg.mxu0
        %1041 = vmatpush.msra.mxu0 0.0
        %1042 = vmatpush.msra.mxu0 0.0
        %1043 = vmatpush.msra.mxu0 0.0
        %1044 = vmatpush.msra.mxu0 0.0
        %1045 = vmatpush.msra.mxu0 0.0
        %1046 = vmatpush.msra.mxu0 0.0
        %1047 = vmatpush.msra.mxu0 0.0
        %1048 = vmatpush.msra.mxu0 0.0
        %1049 = vmatpush.msra.mxu0 0.0
        %1050 = vmatpush.msra.mxu0 0.0
        %1051 = vmatpush.msra.mxu0 0.0
        %1052 = vmatpush.msra.mxu0 %v904
        %1053 = vmatpush.msra.mxu0 %v879
        %1054 = vmatpush.msra.mxu0 %v512
        %1055 = vmatpush.msra.mxu0 %v854
        %1056 = vmatpush.msra.mxu0 %v829
        %1057 = vmatmul.f32.gmra.mxu0 %v1001
        %v1058 = vpop.f32.mrf.mxu0
        %v1059 = vadd.f32 %v982, %v1058
        %1060 = vmatmul.f32.gmra.mxu0 %v1004
        %v1061 = vpop.f32.mrf.mxu0
        %v1062 = vadd.f32 %v987, %v1061
        %1063 = vmatmul.f32.gmra.mxu0 %v1007
        %v1064 = vpop.f32.mrf.mxu0
        %v1065 = vadd.f32 %v992, %v1064
        %1066 = vmatmul.f32.gmra.mxu0 %v1010
        %v1067 = vpop.f32.mrf.mxu0
        %v1068 = vadd.f32 %v997, %v1067
        %1069 = vdwg.mxu0
        %1070 = vmatpush.msra.mxu0 0.0
        %1071 = vmatpush.msra.mxu0 0.0
        %1072 = vmatpush.msra.mxu0 0.0
        %1073 = vmatpush.msra.mxu0 0.0
        %1074 = vmatpush.msra.mxu0 0.0
        %1075 = vmatpush.msra.mxu0 0.0
        %1076 = vmatpush.msra.mxu0 0.0
        %1077 = vmatpush.msra.mxu0 0.0
        %1078 = vmatpush.msra.mxu0 0.0
        %1079 = vmatpush.msra.mxu0 0.0
        %1080 = vmatpush.msra.mxu0 0.0
        %1081 = vmatpush.msra.mxu0 %v905
        %1082 = vmatpush.msra.mxu0 %v880
        %1083 = vmatpush.msra.mxu0 %v532
        %1084 = vmatpush.msra.mxu0 %v855
        %1085 = vmatpush.msra.mxu0 %v830
        %1086 = vmatmul.f32.gmra.mxu0 %v1001
        %v1087 = vpop.f32.mrf.mxu0
        %v1088 = vadd.f32 %v982, %v1087
        %1089 = vmatmul.f32.gmra.mxu0 %v1004
        %v1090 = vpop.f32.mrf.mxu0
        %v1091 = vadd.f32 %v987, %v1090
        %1092 = vmatmul.f32.gmra.mxu0 %v1007
        %v1093 = vpop.f32.mrf.mxu0
        %v1094 = vadd.f32 %v992, %v1093
        %1095 = vmatmul.f32.gmra.mxu0 %v1010
        %v1096 = vpop.f32.mrf.mxu0
        %v1097 = vadd.f32 %v997, %v1096
        %1098 = vdwg.mxu0
        %1099 = vmatpush.msra.mxu0 0.0
        %1100 = vmatpush.msra.mxu0 0.0
        %1101 = vmatpush.msra.mxu0 0.0
        %1102 = vmatpush.msra.mxu0 0.0
        %1103 = vmatpush.msra.mxu0 0.0
        %1104 = vmatpush.msra.mxu0 0.0
        %1105 = vmatpush.msra.mxu0 0.0
        %1106 = vmatpush.msra.mxu0 0.0
        %1107 = vmatpush.msra.mxu0 0.0
        %1108 = vmatpush.msra.mxu0 0.0
        %1109 = vmatpush.msra.mxu0 0.0
        %1110 = vmatpush.msra.mxu0 %v906
        %1111 = vmatpush.msra.mxu0 %v881
        %1112 = vmatpush.msra.mxu0 %v552
        %1113 = vmatpush.msra.mxu0 %v856
        %1114 = vmatpush.msra.mxu0 %v831
        %1115 = vmatmul.f32.gmra.mxu0 %v1001
        %v1116 = vpop.f32.mrf.mxu0
        %v1117 = vadd.f32 %v982, %v1116
        %1118 = vmatmul.f32.gmra.mxu0 %v1004
        %v1119 = vpop.f32.mrf.mxu0
        %v1120 = vadd.f32 %v987, %v1119
        %1121 = vmatmul.f32.gmra.mxu0 %v1007
        %v1122 = vpop.f32.mrf.mxu0
        %v1123 = vadd.f32 %v992, %v1122
        %1124 = vmatmul.f32.gmra.mxu0 %v1010
        %v1125 = vpop.f32.mrf.mxu0
        %v1126 = vadd.f32 %v997, %v1125
        %1127 = vdwg.mxu0
        %1128 = vmatpush.msra.mxu0 0.0
        %1129 = vmatpush.msra.mxu0 0.0
        %1130 = vmatpush.msra.mxu0 0.0
        %1131 = vmatpush.msra.mxu0 0.0
        %1132 = vmatpush.msra.mxu0 0.0
        %1133 = vmatpush.msra.mxu0 0.0
        %1134 = vmatpush.msra.mxu0 0.0
        %1135 = vmatpush.msra.mxu0 0.0
        %1136 = vmatpush.msra.mxu0 0.0
        %1137 = vmatpush.msra.mxu0 0.0
        %1138 = vmatpush.msra.mxu0 0.0
        %1139 = vmatpush.msra.mxu0 %v967
        %1140 = vmatpush.msra.mxu0 %v951
        %1141 = vmatpush.msra.mxu0 %v676
        %1142 = vmatpush.msra.mxu0 %v935
        %1143 = vmatpush.msra.mxu0 %v919
        %1144 = vmatmul.f32.gmra.mxu0 %v1001
        %v1145 = vpop.f32.mrf.mxu0
        %v1146 = vadd.f32 %v982, %v1145
        %1147 = vmatmul.f32.gmra.mxu0 %v1004
        %v1148 = vpop.f32.mrf.mxu0
        %v1149 = vadd.f32 %v987, %v1148
        %1150 = vmatmul.f32.gmra.mxu0 %v1007
        %v1151 = vpop.f32.mrf.mxu0
        %v1152 = vadd.f32 %v992, %v1151
        %1153 = vmatmul.f32.gmra.mxu0 %v1010
        %v1154 = vpop.f32.mrf.mxu0
        %v1155 = vadd.f32 %v997, %v1154
        %1156 = vdwg.mxu0
        %1157 = vmatpush.msra.mxu0 0.0
        %1158 = vmatpush.msra.mxu0 0.0
        %1159 = vmatpush.msra.mxu0 0.0
        %1160 = vmatpush.msra.mxu0 0.0
        %1161 = vmatpush.msra.mxu0 0.0
        %1162 = vmatpush.msra.mxu0 0.0
        %1163 = vmatpush.msra.mxu0 0.0
        %1164 = vmatpush.msra.mxu0 0.0
        %1165 = vmatpush.msra.mxu0 0.0
        %1166 = vmatpush.msra.mxu0 0.0
        %1167 = vmatpush.msra.mxu0 0.0
        %1168 = vmatpush.msra.mxu0 %v968
        %1169 = vmatpush.msra.mxu0 %v952
        %1170 = vmatpush.msra.mxu0 %v696
        %1171 = vmatpush.msra.mxu0 %v936
        %1172 = vmatpush.msra.mxu0 %v920
        %1173 = vmatmul.f32.gmra.mxu0 %v1001
        %v1174 = vpop.f32.mrf.mxu0
        %v1175 = vadd.f32 %v982, %v1174
        %1176 = vmatmul.f32.gmra.mxu0 %v1004
        %v1177 = vpop.f32.mrf.mxu0
        %v1178 = vadd.f32 %v987, %v1177
        %1179 = vmatmul.f32.gmra.mxu0 %v1007
        %v1180 = vpop.f32.mrf.mxu0
        %v1181 = vadd.f32 %v992, %v1180
        %1182 = vmatmul.f32.gmra.mxu0 %v1010
        %v1183 = vpop.f32.mrf.mxu0
        %v1184 = vadd.f32 %v997, %v1183
        %1185 = vdwg.mxu0
        %1186 = vmatpush.msra.mxu0 0.0
        %1187 = vmatpush.msra.mxu0 0.0
        %1188 = vmatpush.msra.mxu0 0.0
        %1189 = vmatpush.msra.mxu0 0.0
        %1190 = vmatpush.msra.mxu0 0.0
        %1191 = vmatpush.msra.mxu0 0.0
        %1192 = vmatpush.msra.mxu0 0.0
        %1193 = vmatpush.msra.mxu0 0.0
        %1194 = vmatpush.msra.mxu0 0.0
        %1195 = vmatpush.msra.mxu0 0.0
        %1196 = vmatpush.msra.mxu0 0.0
        %1197 = vmatpush.msra.mxu0 %v969
        %1198 = vmatpush.msra.mxu0 %v953
        %1199 = vmatpush.msra.mxu0 %v716
        %1200 = vmatpush.msra.mxu0 %v937
        %1201 = vmatpush.msra.mxu0 %v921
        %1202 = vmatmul.f32.gmra.mxu0 %v1001
        %v1203 = vpop.f32.mrf.mxu0
        %v1204 = vadd.f32 %v982, %v1203
        %1205 = vmatmul.f32.gmra.mxu0 %v1004
        %v1206 = vpop.f32.mrf.mxu0
        %v1207 = vadd.f32 %v987, %v1206
        %1208 = vmatmul.f32.gmra.mxu0 %v1007
        %v1209 = vpop.f32.mrf.mxu0
        %v1210 = vadd.f32 %v992, %v1209
        %1211 = vmatmul.f32.gmra.mxu0 %v1010
        %v1212 = vpop.f32.mrf.mxu0
        %v1213 = vadd.f32 %v997, %v1212
        %1214 = vdwg.mxu0
        %1215 = vmatpush.msra.mxu0 0.0
        %1216 = vmatpush.msra.mxu0 0.0
        %1217 = vmatpush.msra.mxu0 0.0
        %1218 = vmatpush.msra.mxu0 0.0
        %1219 = vmatpush.msra.mxu0 0.0
        %1220 = vmatpush.msra.mxu0 0.0
        %1221 = vmatpush.msra.mxu0 0.0
        %1222 = vmatpush.msra.mxu0 0.0
        %1223 = vmatpush.msra.mxu0 0.0
        %1224 = vmatpush.msra.mxu0 0.0
        %1225 = vmatpush.msra.mxu0 0.0
        %1226 = vmatpush.msra.mxu0 %v970
        %1227 = vmatpush.msra.mxu0 %v954
        %1228 = vmatpush.msra.mxu0 %v736
        %1229 = vmatpush.msra.mxu0 %v938
        %1230 = vmatpush.msra.mxu0 %v922
        %1231 = vmatmul.f32.gmra.mxu0 %v1001
        %v1232 = vpop.f32.mrf.mxu0
        %v1233 = vadd.f32 %v982, %v1232
        %1234 = vmatmul.f32.gmra.mxu0 %v1004
        %v1235 = vpop.f32.mrf.mxu0
        %v1236 = vadd.f32 %v987, %v1235
        %1237 = vmatmul.f32.gmra.mxu0 %v1007
        %v1238 = vpop.f32.mrf.mxu0
        %v1239 = vadd.f32 %v992, %v1238
        %1240 = vmatmul.f32.gmra.mxu0 %v1010
        %v1241 = vpop.f32.mrf.mxu0
        %v1242 = vadd.f32 %v997, %v1241
        %1243 = vdwg.mxu0
        %v1244 = vmax.f32 %v1030, 0.0
        %v1245 = vmax.f32 %v1059, 0.0
        %v1246 = vmax.f32 %v1088, 0.0
        %v1247 = vmax.f32 %v1117, 0.0
        %v1248 = vmax.f32 %v1146, 0.0
        %v1249 = vmax.f32 %v1175, 0.0
        %v1250 = vmax.f32 %v1204, 0.0
        %v1251 = vmax.f32 %v1233, 0.0
        %v1252 = vmax.f32 %v1033, 0.0
        %v1253 = vmax.f32 %v1062, 0.0
        %v1254 = vmax.f32 %v1091, 0.0
        %v1255 = vmax.f32 %v1120, 0.0
        %v1256 = vmax.f32 %v1149, 0.0
        %v1257 = vmax.f32 %v1178, 0.0
        %v1258 = vmax.f32 %v1207, 0.0
        %v1259 = vmax.f32 %v1236, 0.0
        %v1260 = vmax.f32 %v1036, 0.0
        %v1261 = vmax.f32 %v1065, 0.0
        %v1262 = vmax.f32 %v1094, 0.0
        %v1263 = vmax.f32 %v1123, 0.0
        %v1264 = vmax.f32 %v1152, 0.0
        %v1265 = vmax.f32 %v1181, 0.0
        %v1266 = vmax.f32 %v1210, 0.0
        %v1267 = vmax.f32 %v1239, 0.0
        %v1268 = vmax.f32 %v1039, 0.0
        %v1269 = vmax.f32 %v1068, 0.0
        %v1270 = vmax.f32 %v1097, 0.0
        %v1271 = vmax.f32 %v1126, 0.0
        %v1272 = vmax.f32 %v1155, 0.0
        %v1273 = vmax.f32 %v1184, 0.0
        %v1274 = vmax.f32 %v1213, 0.0
        %v1275 = vmax.f32 %v1242, 0.0
        %1276 = vrot.lane.b32.xlu0 %v1244, 127
        %v1277 = vpop.permute.xlu0 %1276
        %1278 = vrot.lane.b32.xlu0 %v1252, 127
        %v1279 = vpop.permute.xlu0 %1278
        %1280 = vrot.lane.b32.xlu0 %v1260, 127
        %v1281 = vpop.permute.xlu0 %1280
        %1282 = vrot.lane.b32.xlu0 %v1268, 127
        %v1283 = vpop.permute.xlu0 %1282
        %1284 = vrot.lane.b32.xlu0 %v1245, 127
        %v1285 = vpop.permute.xlu0 %1284
        %1286 = vrot.lane.b32.xlu0 %v1253, 127
        %v1287 = vpop.permute.xlu0 %1286
        %1288 = vrot.lane.b32.xlu0 %v1261, 127
        %v1289 = vpop.permute.xlu0 %1288
        %1290 = vrot.lane.b32.xlu0 %v1269, 127
        %v1291 = vpop.permute.xlu0 %1290
        %1292 = vrot.lane.b32.xlu0 %v1246, 127
        %v1293 = vpop.permute.xlu0 %1292
        %1294 = vrot.lane.b32.xlu0 %v1254, 127
        %v1295 = vpop.permute.xlu0 %1294
        %1296 = vrot.lane.b32.xlu0 %v1262, 127
        %v1297 = vpop.permute.xlu0 %1296
        %1298 = vrot.lane.b32.xlu0 %v1270, 127
        %v1299 = vpop.permute.xlu0 %1298
        %1300 = vrot.lane.b32.xlu0 %v1247, 127
        %v1301 = vpop.permute.xlu0 %1300
        %1302 = vrot.lane.b32.xlu0 %v1255, 127
        %v1303 = vpop.permute.xlu0 %1302
        %1304 = vrot.lane.b32.xlu0 %v1263, 127
        %v1305 = vpop.permute.xlu0 %1304
        %1306 = vrot.lane.b32.xlu0 %v1271, 127
        %v1307 = vpop.permute.xlu0 %1306
        %v1308 = vsel %vm865, %v1293, %v1301
        %v1309 = vsel %vm865, %v1295, %v1303
        %v1310 = vsel %vm865, %v1297, %v1305
        %v1311 = vsel %vm865, %v1299, %v1307
        %v1312 = vsel %vm865, %v1285, %v1293
        %v1313 = vsel %vm865, %v1287, %v1295
        %v1314 = vsel %vm865, %v1289, %v1297
        %v1315 = vsel %vm865, %v1291, %v1299
        %v1316 = vsel %vm865, %v1277, %v1285
        %v1317 = vsel %vm865, %v1279, %v1287
        %v1318 = vsel %vm865, %v1281, %v1289
        %v1319 = vsel %vm865, %v1283, %v1291
        %v1320 = vsel %vm865, %v1301, %v1277
        %v1321 = vsel %vm865, %v1303, %v1279
        %v1322 = vsel %vm865, %v1305, %v1281
        %v1323 = vsel %vm865, %v1307, %v1283
        %v1324 = vsel %vm874, %v1316, 0.0
        %v1325 = vsel %vm875, %v1312, 0.0
        %v1326 = vsel %vm876, %v1308, 0.0
        %v1327 = vsel %vm877, %v1320, 0.0
        %v1328 = vsel %vm874, %v1317, 0.0
        %v1329 = vsel %vm875, %v1313, 0.0
        %v1330 = vsel %vm876, %v1309, 0.0
        %v1331 = vsel %vm877, %v1321, 0.0
        %v1332 = vsel %vm874, %v1318, 0.0
        %v1333 = vsel %vm875, %v1314, 0.0
        %v1334 = vsel %vm876, %v1310, 0.0
        %v1335 = vsel %vm877, %v1322, 0.0
        %v1336 = vsel %vm874, %v1319, 0.0
        %v1337 = vsel %vm875, %v1315, 0.0
        %v1338 = vsel %vm876, %v1311, 0.0
        %v1339 = vsel %vm877, %v1323, 0.0
        %1340 = vrot.lane.b32.xlu0 %v1244, 126
        %v1341 = vpop.permute.xlu0 %1340
        %1342 = vrot.lane.b32.xlu0 %v1252, 126
        %v1343 = vpop.permute.xlu0 %1342
        %1344 = vrot.lane.b32.xlu0 %v1260, 126
        %v1345 = vpop.permute.xlu0 %1344
        %1346 = vrot.lane.b32.xlu0 %v1268, 126
        %v1347 = vpop.permute.xlu0 %1346
        %1348 = vrot.lane.b32.xlu0 %v1245, 126
        %v1349 = vpop.permute.xlu0 %1348
        %1350 = vrot.lane.b32.xlu0 %v1253, 126
        %v1351 = vpop.permute.xlu0 %1350
        %1352 = vrot.lane.b32.xlu0 %v1261, 126
        %v1353 = vpop.permute.xlu0 %1352
        %1354 = vrot.lane.b32.xlu0 %v1269, 126
        %v1355 = vpop.permute.xlu0 %1354
        %1356 = vrot.lane.b32.xlu0 %v1246, 126
        %v1357 = vpop.permute.xlu0 %1356
        %1358 = vrot.lane.b32.xlu0 %v1254, 126
        %v1359 = vpop.permute.xlu0 %1358
        %1360 = vrot.lane.b32.xlu0 %v1262, 126
        %v1361 = vpop.permute.xlu0 %1360
        %1362 = vrot.lane.b32.xlu0 %v1270, 126
        %v1363 = vpop.permute.xlu0 %1362
        %1364 = vrot.lane.b32.xlu0 %v1247, 126
        %v1365 = vpop.permute.xlu0 %1364
        %1366 = vrot.lane.b32.xlu0 %v1255, 126
        %v1367 = vpop.permute.xlu0 %1366
        %1368 = vrot.lane.b32.xlu0 %v1263, 126
        %v1369 = vpop.permute.xlu0 %1368
        %1370 = vrot.lane.b32.xlu0 %v1271, 126
        %v1371 = vpop.permute.xlu0 %1370
        %v1372 = vsel %vm890, %v1357, %v1365
        %v1373 = vsel %vm890, %v1359, %v1367
        %v1374 = vsel %vm890, %v1361, %v1369
        %v1375 = vsel %vm890, %v1363, %v1371
        %v1376 = vsel %vm890, %v1349, %v1357
        %v1377 = vsel %vm890, %v1351, %v1359
        %v1378 = vsel %vm890, %v1353, %v1361
        %v1379 = vsel %vm890, %v1355, %v1363
        %v1380 = vsel %vm890, %v1341, %v1349
        %v1381 = vsel %vm890, %v1343, %v1351
        %v1382 = vsel %vm890, %v1345, %v1353
        %v1383 = vsel %vm890, %v1347, %v1355
        %v1384 = vsel %vm890, %v1365, %v1341
        %v1385 = vsel %vm890, %v1367, %v1343
        %v1386 = vsel %vm890, %v1369, %v1345
        %v1387 = vsel %vm890, %v1371, %v1347
        %v1388 = vsel %vm899, %v1380, 0.0
        %v1389 = vsel %vm900, %v1376, 0.0
        %v1390 = vsel %vm901, %v1372, 0.0
        %v1391 = vsel %vm902, %v1384, 0.0
        %v1392 = vsel %vm899, %v1381, 0.0
        %v1393 = vsel %vm900, %v1377, 0.0
        %v1394 = vsel %vm901, %v1373, 0.0
        %v1395 = vsel %vm902, %v1385, 0.0
        %v1396 = vsel %vm899, %v1382, 0.0
        %v1397 = vsel %vm900, %v1378, 0.0
        %v1398 = vsel %vm901, %v1374, 0.0
        %v1399 = vsel %vm902, %v1386, 0.0
        %v1400 = vsel %vm899, %v1383, 0.0
        %v1401 = vsel %vm900, %v1379, 0.0
        %v1402 = vsel %vm901, %v1375, 0.0
        %v1403 = vsel %vm902, %v1387, 0.0
        %1404 = vrot.lane.b32.xlu0 %v1248, 127
        %v1405 = vpop.permute.xlu0 %1404
        %1406 = vrot.lane.b32.xlu0 %v1256, 127
        %v1407 = vpop.permute.xlu0 %1406
        %1408 = vrot.lane.b32.xlu0 %v1264, 127
        %v1409 = vpop.permute.xlu0 %1408
        %1410 = vrot.lane.b32.xlu0 %v1272, 127
        %v1411 = vpop.permute.xlu0 %1410
        %1412 = vrot.lane.b32.xlu0 %v1249, 127
        %v1413 = vpop.permute.xlu0 %1412
        %1414 = vrot.lane.b32.xlu0 %v1257, 127
        %v1415 = vpop.permute.xlu0 %1414
        %1416 = vrot.lane.b32.xlu0 %v1265, 127
        %v1417 = vpop.permute.xlu0 %1416
        %1418 = vrot.lane.b32.xlu0 %v1273, 127
        %v1419 = vpop.permute.xlu0 %1418
        %1420 = vrot.lane.b32.xlu0 %v1250, 127
        %v1421 = vpop.permute.xlu0 %1420
        %1422 = vrot.lane.b32.xlu0 %v1258, 127
        %v1423 = vpop.permute.xlu0 %1422
        %1424 = vrot.lane.b32.xlu0 %v1266, 127
        %v1425 = vpop.permute.xlu0 %1424
        %1426 = vrot.lane.b32.xlu0 %v1274, 127
        %v1427 = vpop.permute.xlu0 %1426
        %1428 = vrot.lane.b32.xlu0 %v1251, 127
        %v1429 = vpop.permute.xlu0 %1428
        %1430 = vrot.lane.b32.xlu0 %v1259, 127
        %v1431 = vpop.permute.xlu0 %1430
        %1432 = vrot.lane.b32.xlu0 %v1267, 127
        %v1433 = vpop.permute.xlu0 %1432
        %1434 = vrot.lane.b32.xlu0 %v1275, 127
        %v1435 = vpop.permute.xlu0 %1434
        %v1436 = vsel %vm865, %v1421, %v1429
        %v1437 = vsel %vm865, %v1423, %v1431
        %v1438 = vsel %vm865, %v1425, %v1433
        %v1439 = vsel %vm865, %v1427, %v1435
        %v1440 = vsel %vm865, %v1413, %v1421
        %v1441 = vsel %vm865, %v1415, %v1423
        %v1442 = vsel %vm865, %v1417, %v1425
        %v1443 = vsel %vm865, %v1419, %v1427
        %v1444 = vsel %vm865, %v1405, %v1413
        %v1445 = vsel %vm865, %v1407, %v1415
        %v1446 = vsel %vm865, %v1409, %v1417
        %v1447 = vsel %vm865, %v1411, %v1419
        %v1448 = vsel %vm865, %v1429, %v1405
        %v1449 = vsel %vm865, %v1431, %v1407
        %v1450 = vsel %vm865, %v1433, %v1409
        %v1451 = vsel %vm865, %v1435, %v1411
        %v1452 = vsel %vm874, %v1444, 0.0
        %v1453 = vsel %vm875, %v1440, 0.0
        %v1454 = vsel %vm876, %v1436, 0.0
        %v1455 = vsel %vm877, %v1448, 0.0
        %v1456 = vsel %vm874, %v1445, 0.0
        %v1457 = vsel %vm875, %v1441, 0.0
        %v1458 = vsel %vm876, %v1437, 0.0
        %v1459 = vsel %vm877, %v1449, 0.0
        %v1460 = vsel %vm874, %v1446, 0.0
        %v1461 = vsel %vm875, %v1442, 0.0
        %v1462 = vsel %vm876, %v1438, 0.0
        %v1463 = vsel %vm877, %v1450, 0.0
        %v1464 = vsel %vm874, %v1447, 0.0
        %v1465 = vsel %vm875, %v1443, 0.0
        %v1466 = vsel %vm876, %v1439, 0.0
        %v1467 = vsel %vm877, %v1451, 0.0
        %1468 = vrot.lane.b32.xlu0 %v1248, 126
        %v1469 = vpop.permute.xlu0 %1468
        %1470 = vrot.lane.b32.xlu0 %v1256, 126
        %v1471 = vpop.permute.xlu0 %1470
        %1472 = vrot.lane.b32.xlu0 %v1264, 126
        %v1473 = vpop.permute.xlu0 %1472
        %1474 = vrot.lane.b32.xlu0 %v1272, 126
        %v1475 = vpop.permute.xlu0 %1474
        %1476 = vrot.lane.b32.xlu0 %v1249, 126
        %v1477 = vpop.permute.xlu0 %1476
        %1478 = vrot.lane.b32.xlu0 %v1257, 126
        %v1479 = vpop.permute.xlu0 %1478
        %1480 = vrot.lane.b32.xlu0 %v1265, 126
        %v1481 = vpop.permute.xlu0 %1480
        %1482 = vrot.lane.b32.xlu0 %v1273, 126
        %v1483 = vpop.permute.xlu0 %1482
        %1484 = vrot.lane.b32.xlu0 %v1250, 126
        %v1485 = vpop.permute.xlu0 %1484
        %1486 = vrot.lane.b32.xlu0 %v1258, 126
        %v1487 = vpop.permute.xlu0 %1486
        %1488 = vrot.lane.b32.xlu0 %v1266, 126
        %v1489 = vpop.permute.xlu0 %1488
        %1490 = vrot.lane.b32.xlu0 %v1274, 126
        %v1491 = vpop.permute.xlu0 %1490
        %1492 = vrot.lane.b32.xlu0 %v1251, 126
        %v1493 = vpop.permute.xlu0 %1492
        %1494 = vrot.lane.b32.xlu0 %v1259, 126
        %v1495 = vpop.permute.xlu0 %1494
        %1496 = vrot.lane.b32.xlu0 %v1267, 126
        %v1497 = vpop.permute.xlu0 %1496
        %1498 = vrot.lane.b32.xlu0 %v1275, 126
        %v1499 = vpop.permute.xlu0 %1498
        %v1500 = vsel %vm890, %v1485, %v1493
        %v1501 = vsel %vm890, %v1487, %v1495
        %v1502 = vsel %vm890, %v1489, %v1497
        %v1503 = vsel %vm890, %v1491, %v1499
        %v1504 = vsel %vm890, %v1477, %v1485
        %v1505 = vsel %vm890, %v1479, %v1487
        %v1506 = vsel %vm890, %v1481, %v1489
        %v1507 = vsel %vm890, %v1483, %v1491
        %v1508 = vsel %vm890, %v1469, %v1477
        %v1509 = vsel %vm890, %v1471, %v1479
        %v1510 = vsel %vm890, %v1473, %v1481
        %v1511 = vsel %vm890, %v1475, %v1483
        %v1512 = vsel %vm890, %v1493, %v1469
        %v1513 = vsel %vm890, %v1495, %v1471
        %v1514 = vsel %vm890, %v1497, %v1473
        %v1515 = vsel %vm890, %v1499, %v1475
        %v1516 = vsel %vm899, %v1508, 0.0
        %v1517 = vsel %vm900, %v1504, 0.0
        %v1518 = vsel %vm901, %v1500, 0.0
        %v1519 = vsel %vm902, %v1512, 0.0
        %v1520 = vsel %vm899, %v1509, 0.0
        %v1521 = vsel %vm900, %v1505, 0.0
        %v1522 = vsel %vm901, %v1501, 0.0
        %v1523 = vsel %vm902, %v1513, 0.0
        %v1524 = vsel %vm899, %v1510, 0.0
        %v1525 = vsel %vm900, %v1506, 0.0
        %v1526 = vsel %vm901, %v1502, 0.0
        %v1527 = vsel %vm902, %v1514, 0.0
        %v1528 = vsel %vm899, %v1511, 0.0
        %v1529 = vsel %vm900, %v1507, 0.0
        %v1530 = vsel %vm901, %v1503, 0.0
        %v1531 = vsel %vm902, %v1515, 0.0
        %v1532 = vld [vmem:[%s4] sm:$0xff]
        %v1533 = vld [vmem:[%s4 + $0x8] sm:$0xff]
        %v1534 = vld [vmem:[%s4 + $0x10] sm:$0xff]
        %v1535 = vld [vmem:[%s4 + $0x18] sm:$0xff]
        %v1536 = vld [vmem:[%s5] sm:$0xff]
        %v1537 = vld [vmem:[%s5 + $0x8] sm:$0xff]
        %v1538 = vld [vmem:[%s5 + $0x10] sm:$0xff]
        %v1539 = vld [vmem:[%s5 + $0x18] sm:$0xff]
        %1541 = vset.pattern.permute.xlu0 0
        %1542 = vperm.xlu0 %1541, %v1536
        %v1543 = vpop.permute.xlu0 %1542
        %1546 = vset.pattern.permute.xlu0 0
        %1547 = vperm.xlu0 %1546, %v1537
        %v1548 = vpop.permute.xlu0 %1547
        %1551 = vset.pattern.permute.xlu0 0
        %1552 = vperm.xlu0 %1551, %v1538
        %v1553 = vpop.permute.xlu0 %1552
        %1556 = vset.pattern.permute.xlu0 0
        %1557 = vperm.xlu0 %1556, %v1539
        %v1558 = vpop.permute.xlu0 %1557
        %vm1560 = vcmask 785408
        %v1562 = vsel %vm1560, %v1532, 0
        %v1565 = vsel %vm1560, %v1533, 0
        %v1568 = vsel %vm1560, %v1534, 0
        %v1571 = vsel %vm1560, %v1535, 0
        %1573 = vmatpush.msra.mxu0 0.0
        %1574 = vmatpush.msra.mxu0 0.0
        %1575 = vmatpush.msra.mxu0 0.0
        %1576 = vmatpush.msra.mxu0 0.0
        %1577 = vmatpush.msra.mxu0 %v1400
        %1578 = vmatpush.msra.mxu0 %v1396
        %1579 = vmatpush.msra.mxu0 %v1392
        %1580 = vmatpush.msra.mxu0 %v1388
        %1581 = vmatpush.msra.mxu0 %v1336
        %1582 = vmatpush.msra.mxu0 %v1332
        %1583 = vmatpush.msra.mxu0 %v1328
        %1584 = vmatpush.msra.mxu0 %v1324
        %1585 = vmatpush.msra.mxu0 %v1268
        %1586 = vmatpush.msra.mxu0 %v1260
        %1587 = vmatpush.msra.mxu0 %v1252
        %1588 = vmatpush.msra.mxu0 %v1244
        %1589 = vmatmul.f32.gmra.mxu0 %v1562
        %v1590 = vpop.f32.mrf.mxu0
        %v1591 = vadd.f32 %v1543, %v1590
        %1592 = vmatmul.f32.gmra.mxu0 %v1565
        %v1593 = vpop.f32.mrf.mxu0
        %v1594 = vadd.f32 %v1548, %v1593
        %1595 = vmatmul.f32.gmra.mxu0 %v1568
        %v1596 = vpop.f32.mrf.mxu0
        %v1597 = vadd.f32 %v1553, %v1596
        %1598 = vmatmul.f32.gmra.mxu0 %v1571
        %v1599 = vpop.f32.mrf.mxu0
        %v1600 = vadd.f32 %v1558, %v1599
        %1601 = vdwg.mxu0
        %1602 = vmatpush.msra.mxu0 0.0
        %1603 = vmatpush.msra.mxu0 0.0
        %1604 = vmatpush.msra.mxu0 0.0
        %1605 = vmatpush.msra.mxu0 0.0
        %1606 = vmatpush.msra.mxu0 %v1401
        %1607 = vmatpush.msra.mxu0 %v1397
        %1608 = vmatpush.msra.mxu0 %v1393
        %1609 = vmatpush.msra.mxu0 %v1389
        %1610 = vmatpush.msra.mxu0 %v1337
        %1611 = vmatpush.msra.mxu0 %v1333
        %1612 = vmatpush.msra.mxu0 %v1329
        %1613 = vmatpush.msra.mxu0 %v1325
        %1614 = vmatpush.msra.mxu0 %v1269
        %1615 = vmatpush.msra.mxu0 %v1261
        %1616 = vmatpush.msra.mxu0 %v1253
        %1617 = vmatpush.msra.mxu0 %v1245
        %1618 = vmatmul.f32.gmra.mxu0 %v1562
        %v1619 = vpop.f32.mrf.mxu0
        %v1620 = vadd.f32 %v1543, %v1619
        %1621 = vmatmul.f32.gmra.mxu0 %v1565
        %v1622 = vpop.f32.mrf.mxu0
        %v1623 = vadd.f32 %v1548, %v1622
        %1624 = vmatmul.f32.gmra.mxu0 %v1568
        %v1625 = vpop.f32.mrf.mxu0
        %v1626 = vadd.f32 %v1553, %v1625
        %1627 = vmatmul.f32.gmra.mxu0 %v1571
        %v1628 = vpop.f32.mrf.mxu0
        %v1629 = vadd.f32 %v1558, %v1628
        %1630 = vdwg.mxu0
        %1631 = vmatpush.msra.mxu0 0.0
        %1632 = vmatpush.msra.mxu0 0.0
        %1633 = vmatpush.msra.mxu0 0.0
        %1634 = vmatpush.msra.mxu0 0.0
        %1635 = vmatpush.msra.mxu0 %v1402
        %1636 = vmatpush.msra.mxu0 %v1398
        %1637 = vmatpush.msra.mxu0 %v1394
        %1638 = vmatpush.msra.mxu0 %v1390
        %1639 = vmatpush.msra.mxu0 %v1338
        %1640 = vmatpush.msra.mxu0 %v1334
        %1641 = vmatpush.msra.mxu0 %v1330
        %1642 = vmatpush.msra.mxu0 %v1326
        %1643 = vmatpush.msra.mxu0 %v1270
        %1644 = vmatpush.msra.mxu0 %v1262
        %1645 = vmatpush.msra.mxu0 %v1254
        %1646 = vmatpush.msra.mxu0 %v1246
        %1647 = vmatmul.f32.gmra.mxu0 %v1562
        %v1648 = vpop.f32.mrf.mxu0
        %v1649 = vadd.f32 %v1543, %v1648
        %1650 = vmatmul.f32.gmra.mxu0 %v1565
        %v1651 = vpop.f32.mrf.mxu0
        %v1652 = vadd.f32 %v1548, %v1651
        %1653 = vmatmul.f32.gmra.mxu0 %v1568
        %v1654 = vpop.f32.mrf.mxu0
        %v1655 = vadd.f32 %v1553, %v1654
        %1656 = vmatmul.f32.gmra.mxu0 %v1571
        %v1657 = vpop.f32.mrf.mxu0
        %v1658 = vadd.f32 %v1558, %v1657
        %1659 = vdwg.mxu0
        %1660 = vmatpush.msra.mxu0 0.0
        %1661 = vmatpush.msra.mxu0 0.0
        %1662 = vmatpush.msra.mxu0 0.0
        %1663 = vmatpush.msra.mxu0 0.0
        %1664 = vmatpush.msra.mxu0 %v1403
        %1665 = vmatpush.msra.mxu0 %v1399
        %1666 = vmatpush.msra.mxu0 %v1395
        %1667 = vmatpush.msra.mxu0 %v1391
        %1668 = vmatpush.msra.mxu0 %v1339
        %1669 = vmatpush.msra.mxu0 %v1335
        %1670 = vmatpush.msra.mxu0 %v1331
        %1671 = vmatpush.msra.mxu0 %v1327
        %1672 = vmatpush.msra.mxu0 %v1271
        %1673 = vmatpush.msra.mxu0 %v1263
        %1674 = vmatpush.msra.mxu0 %v1255
        %1675 = vmatpush.msra.mxu0 %v1247
        %1676 = vmatmul.f32.gmra.mxu0 %v1562
        %v1677 = vpop.f32.mrf.mxu0
        %v1678 = vadd.f32 %v1543, %v1677
        %1679 = vmatmul.f32.gmra.mxu0 %v1565
        %v1680 = vpop.f32.mrf.mxu0
        %v1681 = vadd.f32 %v1548, %v1680
        %1682 = vmatmul.f32.gmra.mxu0 %v1568
        %v1683 = vpop.f32.mrf.mxu0
        %v1684 = vadd.f32 %v1553, %v1683
        %1685 = vmatmul.f32.gmra.mxu0 %v1571
        %v1686 = vpop.f32.mrf.mxu0
        %v1687 = vadd.f32 %v1558, %v1686
        %1688 = vdwg.mxu0
        %1689 = vmatpush.msra.mxu0 0.0
        %1690 = vmatpush.msra.mxu0 0.0
        %1691 = vmatpush.msra.mxu0 0.0
        %1692 = vmatpush.msra.mxu0 0.0
        %1693 = vmatpush.msra.mxu0 %v1528
        %1694 = vmatpush.msra.mxu0 %v1524
        %1695 = vmatpush.msra.mxu0 %v1520
        %1696 = vmatpush.msra.mxu0 %v1516
        %1697 = vmatpush.msra.mxu0 %v1464
        %1698 = vmatpush.msra.mxu0 %v1460
        %1699 = vmatpush.msra.mxu0 %v1456
        %1700 = vmatpush.msra.mxu0 %v1452
        %1701 = vmatpush.msra.mxu0 %v1272
        %1702 = vmatpush.msra.mxu0 %v1264
        %1703 = vmatpush.msra.mxu0 %v1256
        %1704 = vmatpush.msra.mxu0 %v1248
        %1705 = vmatmul.f32.gmra.mxu0 %v1562
        %v1706 = vpop.f32.mrf.mxu0
        %v1707 = vadd.f32 %v1543, %v1706
        %1708 = vmatmul.f32.gmra.mxu0 %v1565
        %v1709 = vpop.f32.mrf.mxu0
        %v1710 = vadd.f32 %v1548, %v1709
        %1711 = vmatmul.f32.gmra.mxu0 %v1568
        %v1712 = vpop.f32.mrf.mxu0
        %v1713 = vadd.f32 %v1553, %v1712
        %1714 = vmatmul.f32.gmra.mxu0 %v1571
        %v1715 = vpop.f32.mrf.mxu0
        %v1716 = vadd.f32 %v1558, %v1715
        %1717 = vdwg.mxu0
        %1718 = vmatpush.msra.mxu0 0.0
        %1719 = vmatpush.msra.mxu0 0.0
        %1720 = vmatpush.msra.mxu0 0.0
        %1721 = vmatpush.msra.mxu0 0.0
        %1722 = vmatpush.msra.mxu0 %v1529
        %1723 = vmatpush.msra.mxu0 %v1525
        %1724 = vmatpush.msra.mxu0 %v1521
        %1725 = vmatpush.msra.mxu0 %v1517
        %1726 = vmatpush.msra.mxu0 %v1465
        %1727 = vmatpush.msra.mxu0 %v1461
        %1728 = vmatpush.msra.mxu0 %v1457
        %1729 = vmatpush.msra.mxu0 %v1453
        %1730 = vmatpush.msra.mxu0 %v1273
        %1731 = vmatpush.msra.mxu0 %v1265
        %1732 = vmatpush.msra.mxu0 %v1257
        %1733 = vmatpush.msra.mxu0 %v1249
        %1734 = vmatmul.f32.gmra.mxu0 %v1562
        %v1735 = vpop.f32.mrf.mxu0
        %v1736 = vadd.f32 %v1543, %v1735
        %1737 = vmatmul.f32.gmra.mxu0 %v1565
        %v1738 = vpop.f32.mrf.mxu0
        %v1739 = vadd.f32 %v1548, %v1738
        %1740 = vmatmul.f32.gmra.mxu0 %v1568
        %v1741 = vpop.f32.mrf.mxu0
        %v1742 = vadd.f32 %v1553, %v1741
        %1743 = vmatmul.f32.gmra.mxu0 %v1571
        %v1744 = vpop.f32.mrf.mxu0
        %v1745 = vadd.f32 %v1558, %v1744
        %1746 = vdwg.mxu0
        %1747 = vmatpush.msra.mxu0 0.0
        %1748 = vmatpush.msra.mxu0 0.0
        %1749 = vmatpush.msra.mxu0 0.0
        %1750 = vmatpush.msra.mxu0 0.0
        %1751 = vmatpush.msra.mxu0 %v1530
        %1752 = vmatpush.msra.mxu0 %v1526
        %1753 = vmatpush.msra.mxu0 %v1522
        %1754 = vmatpush.msra.mxu0 %v1518
        %1755 = vmatpush.msra.mxu0 %v1466
        %1756 = vmatpush.msra.mxu0 %v1462
        %1757 = vmatpush.msra.mxu0 %v1458
        %1758 = vmatpush.msra.mxu0 %v1454
        %1759 = vmatpush.msra.mxu0 %v1274
        %1760 = vmatpush.msra.mxu0 %v1266
        %1761 = vmatpush.msra.mxu0 %v1258
        %1762 = vmatpush.msra.mxu0 %v1250
        %1763 = vmatmul.f32.gmra.mxu0 %v1562
        %v1764 = vpop.f32.mrf.mxu0
        %v1765 = vadd.f32 %v1543, %v1764
        %1766 = vmatmul.f32.gmra.mxu0 %v1565
        %v1767 = vpop.f32.mrf.mxu0
        %v1768 = vadd.f32 %v1548, %v1767
        %1769 = vmatmul.f32.gmra.mxu0 %v1568
        %v1770 = vpop.f32.mrf.mxu0
        %v1771 = vadd.f32 %v1553, %v1770
        %1772 = vmatmul.f32.gmra.mxu0 %v1571
        %v1773 = vpop.f32.mrf.mxu0
        %v1774 = vadd.f32 %v1558, %v1773
        %1775 = vdwg.mxu0
        %1776 = vmatpush.msra.mxu0 0.0
        %1777 = vmatpush.msra.mxu0 0.0
        %1778 = vmatpush.msra.mxu0 0.0
        %1779 = vmatpush.msra.mxu0 0.0
        %1780 = vmatpush.msra.mxu0 %v1531
        %1781 = vmatpush.msra.mxu0 %v1527
        %1782 = vmatpush.msra.mxu0 %v1523
        %1783 = vmatpush.msra.mxu0 %v1519
        %1784 = vmatpush.msra.mxu0 %v1467
        %1785 = vmatpush.msra.mxu0 %v1463
        %1786 = vmatpush.msra.mxu0 %v1459
        %1787 = vmatpush.msra.mxu0 %v1455
        %1788 = vmatpush.msra.mxu0 %v1275
        %1789 = vmatpush.msra.mxu0 %v1267
        %1790 = vmatpush.msra.mxu0 %v1259
        %1791 = vmatpush.msra.mxu0 %v1251
        %1792 = vmatmul.f32.gmra.mxu0 %v1562
        %v1793 = vpop.f32.mrf.mxu0
        %v1794 = vadd.f32 %v1543, %v1793
        %1795 = vmatmul.f32.gmra.mxu0 %v1565
        %v1796 = vpop.f32.mrf.mxu0
        %v1797 = vadd.f32 %v1548, %v1796
        %1798 = vmatmul.f32.gmra.mxu0 %v1568
        %v1799 = vpop.f32.mrf.mxu0
        %v1800 = vadd.f32 %v1553, %v1799
        %1801 = vmatmul.f32.gmra.mxu0 %v1571
        %v1802 = vpop.f32.mrf.mxu0
        %v1803 = vadd.f32 %v1558, %v1802
        %1804 = vdwg.mxu0
        %v1805 = vmax.f32 %v1591, 0.0
        %v1806 = vmax.f32 %v1620, 0.0
        %v1807 = vmax.f32 %v1649, 0.0
        %v1808 = vmax.f32 %v1678, 0.0
        %v1809 = vmax.f32 %v1707, 0.0
        %v1810 = vmax.f32 %v1736, 0.0
        %v1811 = vmax.f32 %v1765, 0.0
        %v1812 = vmax.f32 %v1794, 0.0
        %v1813 = vmax.f32 %v1594, 0.0
        %v1814 = vmax.f32 %v1623, 0.0
        %v1815 = vmax.f32 %v1652, 0.0
        %v1816 = vmax.f32 %v1681, 0.0
        %v1817 = vmax.f32 %v1710, 0.0
        %v1818 = vmax.f32 %v1739, 0.0
        %v1819 = vmax.f32 %v1768, 0.0
        %v1820 = vmax.f32 %v1797, 0.0
        %v1821 = vmax.f32 %v1597, 0.0
        %v1822 = vmax.f32 %v1626, 0.0
        %v1823 = vmax.f32 %v1655, 0.0
        %v1824 = vmax.f32 %v1684, 0.0
        %v1825 = vmax.f32 %v1713, 0.0
        %v1826 = vmax.f32 %v1742, 0.0
        %v1827 = vmax.f32 %v1771, 0.0
        %v1828 = vmax.f32 %v1800, 0.0
        %v1829 = vmax.f32 %v1600, 0.0
        %v1830 = vmax.f32 %v1629, 0.0
        %v1831 = vmax.f32 %v1658, 0.0
        %v1832 = vmax.f32 %v1687, 0.0
        %v1833 = vmax.f32 %v1716, 0.0
        %v1834 = vmax.f32 %v1745, 0.0
        %v1835 = vmax.f32 %v1774, 0.0
        %v1836 = vmax.f32 %v1803, 0.0
        %v1837 = vld [vmem:[#allocation8] sm:$0xff]
        %vm1838 = vcmask 261120
        %v1840 = vsel %vm1838, %v1837, 0
        %1842 = vmatpush.msra.mxu0 0.0
        %1843 = vmatpush.msra.mxu0 0.0
        %1844 = vmatpush.msra.mxu0 0.0
        %1845 = vmatpush.msra.mxu0 0.0
        %1846 = vmatpush.msra.mxu0 0.0
        %1847 = vmatpush.msra.mxu0 0.0
        %1848 = vmatpush.msra.mxu0 0.0
        %1849 = vmatpush.msra.mxu0 0.0
        %1850 = vmatpush.msra.mxu0 0.0
        %1851 = vmatpush.msra.mxu0 0.0
        %1852 = vmatpush.msra.mxu0 0.0
        %1853 = vmatpush.msra.mxu0 0.0
        %1854 = vmatpush.msra.mxu0 %v1829
        %1855 = vmatpush.msra.mxu0 %v1821
        %1856 = vmatpush.msra.mxu0 %v1813
        %1857 = vmatpush.msra.mxu0 %v1805
        %1858 = vmatmul.f32.gmra.mxu0 %v1840
        %v1859 = vpop.f32.mrf.mxu0
        %v1860 = vadd.f32 0.0, %v1859
        %1861 = vdwg.mxu0
        %1862 = vmatpush.msra.mxu0 0.0
        %1863 = vmatpush.msra.mxu0 0.0
        %1864 = vmatpush.msra.mxu0 0.0
        %1865 = vmatpush.msra.mxu0 0.0
        %1866 = vmatpush.msra.mxu0 0.0
        %1867 = vmatpush.msra.mxu0 0.0
        %1868 = vmatpush.msra.mxu0 0.0
        %1869 = vmatpush.msra.mxu0 0.0
        %1870 = vmatpush.msra.mxu0 0.0
        %1871 = vmatpush.msra.mxu0 0.0
        %1872 = vmatpush.msra.mxu0 0.0
        %1873 = vmatpush.msra.mxu0 0.0
        %1874 = vmatpush.msra.mxu0 %v1830
        %1875 = vmatpush.msra.mxu0 %v1822
        %1876 = vmatpush.msra.mxu0 %v1814
        %1877 = vmatpush.msra.mxu0 %v1806
        %1878 = vmatmul.f32.gmra.mxu0 %v1840
        %v1879 = vpop.f32.mrf.mxu0
        %v1880 = vadd.f32 0.0, %v1879
        %1881 = vdwg.mxu0
        %1882 = vmatpush.msra.mxu0 0.0
        %1883 = vmatpush.msra.mxu0 0.0
        %1884 = vmatpush.msra.mxu0 0.0
        %1885 = vmatpush.msra.mxu0 0.0
        %1886 = vmatpush.msra.mxu0 0.0
        %1887 = vmatpush.msra.mxu0 0.0
        %1888 = vmatpush.msra.mxu0 0.0
        %1889 = vmatpush.msra.mxu0 0.0
        %1890 = vmatpush.msra.mxu0 0.0
        %1891 = vmatpush.msra.mxu0 0.0
        %1892 = vmatpush.msra.mxu0 0.0
        %1893 = vmatpush.msra.mxu0 0.0
        %1894 = vmatpush.msra.mxu0 %v1831
        %1895 = vmatpush.msra.mxu0 %v1823
        %1896 = vmatpush.msra.mxu0 %v1815
        %1897 = vmatpush.msra.mxu0 %v1807
        %1898 = vmatmul.f32.gmra.mxu0 %v1840
        %v1899 = vpop.f32.mrf.mxu0
        %v1900 = vadd.f32 0.0, %v1899
        %1901 = vdwg.mxu0
        %1902 = vmatpush.msra.mxu0 0.0
        %1903 = vmatpush.msra.mxu0 0.0
        %1904 = vmatpush.msra.mxu0 0.0
        %1905 = vmatpush.msra.mxu0 0.0
        %1906 = vmatpush.msra.mxu0 0.0
        %1907 = vmatpush.msra.mxu0 0.0
        %1908 = vmatpush.msra.mxu0 0.0
        %1909 = vmatpush.msra.mxu0 0.0
        %1910 = vmatpush.msra.mxu0 0.0
        %1911 = vmatpush.msra.mxu0 0.0
        %1912 = vmatpush.msra.mxu0 0.0
        %1913 = vmatpush.msra.mxu0 0.0
        %1914 = vmatpush.msra.mxu0 %v1832
        %1915 = vmatpush.msra.mxu0 %v1824
        %1916 = vmatpush.msra.mxu0 %v1816
        %1917 = vmatpush.msra.mxu0 %v1808
        %1918 = vmatmul.f32.gmra.mxu0 %v1840
        %v1919 = vpop.f32.mrf.mxu0
        %v1920 = vadd.f32 0.0, %v1919
        %1921 = vdwg.mxu0
        %1922 = vmatpush.msra.mxu0 0.0
        %1923 = vmatpush.msra.mxu0 0.0
        %1924 = vmatpush.msra.mxu0 0.0
        %1925 = vmatpush.msra.mxu0 0.0
        %1926 = vmatpush.msra.mxu0 0.0
        %1927 = vmatpush.msra.mxu0 0.0
        %1928 = vmatpush.msra.mxu0 0.0
        %1929 = vmatpush.msra.mxu0 0.0
        %1930 = vmatpush.msra.mxu0 0.0
        %1931 = vmatpush.msra.mxu0 0.0
        %1932 = vmatpush.msra.mxu0 0.0
        %1933 = vmatpush.msra.mxu0 0.0
        %1934 = vmatpush.msra.mxu0 %v1833
        %1935 = vmatpush.msra.mxu0 %v1825
        %1936 = vmatpush.msra.mxu0 %v1817
        %1937 = vmatpush.msra.mxu0 %v1809
        %1938 = vmatmul.f32.gmra.mxu0 %v1840
        %v1939 = vpop.f32.mrf.mxu0
        %v1940 = vadd.f32 0.0, %v1939
        %1941 = vdwg.mxu0
        %1942 = vmatpush.msra.mxu0 0.0
        %1943 = vmatpush.msra.mxu0 0.0
        %1944 = vmatpush.msra.mxu0 0.0
        %1945 = vmatpush.msra.mxu0 0.0
        %1946 = vmatpush.msra.mxu0 0.0
        %1947 = vmatpush.msra.mxu0 0.0
        %1948 = vmatpush.msra.mxu0 0.0
        %1949 = vmatpush.msra.mxu0 0.0
        %1950 = vmatpush.msra.mxu0 0.0
        %1951 = vmatpush.msra.mxu0 0.0
        %1952 = vmatpush.msra.mxu0 0.0
        %1953 = vmatpush.msra.mxu0 0.0
        %1954 = vmatpush.msra.mxu0 %v1834
        %1955 = vmatpush.msra.mxu0 %v1826
        %1956 = vmatpush.msra.mxu0 %v1818
        %1957 = vmatpush.msra.mxu0 %v1810
        %1958 = vmatmul.f32.gmra.mxu0 %v1840
        %v1959 = vpop.f32.mrf.mxu0
        %v1960 = vadd.f32 0.0, %v1959
        %1961 = vdwg.mxu0
        %1962 = vmatpush.msra.mxu0 0.0
        %1963 = vmatpush.msra.mxu0 0.0
        %1964 = vmatpush.msra.mxu0 0.0
        %1965 = vmatpush.msra.mxu0 0.0
        %1966 = vmatpush.msra.mxu0 0.0
        %1967 = vmatpush.msra.mxu0 0.0
        %1968 = vmatpush.msra.mxu0 0.0
        %1969 = vmatpush.msra.mxu0 0.0
        %1970 = vmatpush.msra.mxu0 0.0
        %1971 = vmatpush.msra.mxu0 0.0
        %1972 = vmatpush.msra.mxu0 0.0
        %1973 = vmatpush.msra.mxu0 0.0
        %1974 = vmatpush.msra.mxu0 %v1835
        %1975 = vmatpush.msra.mxu0 %v1827
        %1976 = vmatpush.msra.mxu0 %v1819
        %1977 = vmatpush.msra.mxu0 %v1811
        %1978 = vmatmul.f32.gmra.mxu0 %v1840
        %v1979 = vpop.f32.mrf.mxu0
        %v1980 = vadd.f32 0.0, %v1979
        %1981 = vdwg.mxu0
        %1982 = vmatpush.msra.mxu0 0.0
        %1983 = vmatpush.msra.mxu0 0.0
        %1984 = vmatpush.msra.mxu0 0.0
        %1985 = vmatpush.msra.mxu0 0.0
        %1986 = vmatpush.msra.mxu0 0.0
        %1987 = vmatpush.msra.mxu0 0.0
        %1988 = vmatpush.msra.mxu0 0.0
        %1989 = vmatpush.msra.mxu0 0.0
        %1990 = vmatpush.msra.mxu0 0.0
        %1991 = vmatpush.msra.mxu0 0.0
        %1992 = vmatpush.msra.mxu0 0.0
        %1993 = vmatpush.msra.mxu0 0.0
        %1994 = vmatpush.msra.mxu0 %v1836
        %1995 = vmatpush.msra.mxu0 %v1828
        %1996 = vmatpush.msra.mxu0 %v1820
        %1997 = vmatpush.msra.mxu0 %v1812
        %1998 = vmatmul.f32.gmra.mxu0 %v1840
        %v1999 = vpop.f32.mrf.mxu0
        %v2000 = vadd.f32 0.0, %v1999
        %2001 = vdwg.mxu0
        %v2002 = vld [vmem:[#allocation2] sm:$0x1]
        %2004 = vset.pattern.permute.xlu0 0
        %2005 = vperm.xlu0 %2004, %v2002
        %v2006 = vpop.permute.xlu0 %2005
        %v2008 = vperm.slane %v2006, 0
        %v2009 = vadd.f32 %v1860, %v2008
        %v2010 = vadd.f32 %v1880, %v2008
        %v2011 = vadd.f32 %v1900, %v2008
        %v2012 = vadd.f32 %v1920, %v2008
        %v2013 = vadd.f32 %v1940, %v2008
        %v2014 = vadd.f32 %v1960, %v2008
        %v2015 = vadd.f32 %v1980, %v2008
        %v2016 = vadd.f32 %v2000, %v2008
        %v2025 = vrot.slane %v2010, 7
        %v2026 = vrot.slane %v2011, 6
        %v2027 = vrot.slane %v2012, 5
        %v2028 = vrot.slane %v2013, 4
        %v2029 = vrot.slane %v2014, 3
        %v2030 = vrot.slane %v2015, 2
        %v2031 = vrot.slane %v2016, 1
        %vm2032 = vcmask 1040384
        %v2033 = vsel %vm2032, %v2009, %v2025
        %vm2034 = vcmask 1042434
        %v2035 = vsel %vm2034, %v2026, %v2027
        %vm2036 = vcmask 1041408
        %v2037 = vsel %vm2036, %v2033, %v2035
        %vm2038 = vcmask 1044484
        %v2039 = vsel %vm2038, %v2028, %v2029
        %vm2040 = vcmask 1046534
        %v2041 = vsel %vm2040, %v2030, %v2031
        %vm2042 = vcmask 1045508
        %v2043 = vsel %vm2042, %v2039, %v2041
        %vm2044 = vcmask 1043456
        %v2045 = vsel %vm2044, %v2037, %v2043
        %2047 = vst [vmem:[%s354] sm:$0xff] %v2045
        %s2048 = sand.u32 %s209, 1
        %s2049 = scalar_lea.sflag [#allocation5], %s2048
        %s2050 = sand.u32 %s209, 1
        %s2051 = smul.addr %s2050, 8
        %s2052 = scalar_lea.vmem [#allocation9], %s2051
        // Predicated region
        $region65: #{tpu_custom_call.1} parent=51 // pred_check
          %p2053 = pneg %p219
        $region66: #{tpu_custom_call.1} parent=51 // pred_check_branch
          %2055 = sbr.rel (%p2053) target = $region68
        $region67: #{tpu_custom_call.1} parent=51 // pred_region
          %2057 = vsyncadd %s2049, 0
          %s2058 = smul.addr %s28, 8
          %s2059 = scalar_lea.hbm %s8, %s2058
          %s2061 = sshll.u32 %s2052, 4
          %s2062 = int_to_ptr.vmem [resolvable:$true] %s2061
          %s2063 = sshll.u32 %s2059, 4
          %s2064 = int_to_ptr.hbm [resolvable:$true] %s2063
          %2066 = dma.vmem_to_hbm [thread:$0]  %s2062, 128, %s2064, %s2049
        $region68: #{tpu_custom_call.1} parent=51 // pred_fallthru
          _
      $region52: #{tpu_custom_call.1} parent=5 // pred_fallthru
        _
      %p2067 = scmp.le.s32.totalorder 2, %s23
      // Predicated region
      $region69: #{tpu_custom_call.1} parent=5 // pred_check
        %p2068 = pneg %p2067
      $region70: #{tpu_custom_call.1} parent=5 // pred_check_branch
        %2070 = sbr.rel (%p2068) target = $region72
      $region71: #{tpu_custom_call.1} parent=5 // pred_region
        %s2071 = ssub.s32 %s23, 2
        // Predicated region
        $region73: #{tpu_custom_call.1} parent=71 // pred_check
          %p2072 = pneg %p225
        $region74: #{tpu_custom_call.1} parent=71 // pred_check_branch
          %2074 = sbr.rel (%p2072) target = $region76
        $region75: #{tpu_custom_call.1} parent=71 // pred_region
          %s2075 = sand.u32 %s210, 1
          %s2076 = scalar_lea.sflag [#allocation5], %s2075
          %s2077 = sand.u32 %s210, 1
          %s2078 = smul.addr %s2077, 8
          %s2079 = scalar_lea.vmem [#allocation9], %s2078
          %2081 = dma.done %s2076, 128
        $region76: #{tpu_custom_call.1} parent=71 // pred_fallthru
          _
      $region72: #{tpu_custom_call.1} parent=5 // pred_fallthru
        _
    $region6: #{tpu_custom_call.1} parent=1 // loop_footer
      %s27 = sadd.s32 1, %s23
    $region7: #{tpu_custom_call.1} parent=1 // loop_footer_branch
      %22 = sbr.rel target = $region3
    $region8: #{tpu_custom_call.1} parent=1 // loop_exit
      _
    %2082 = vsyncpa [#allocation4], 1
    %s2083 = scalar_lea.sflag [#allocation4], 1
    %2084 = vsyncpa %s2083, 1
    %2085 = vsyncpa [#allocation7], 1
    %2086 = vsyncpa [#allocation5], 1
    %s2087 = scalar_lea.sflag [#allocation5], 1
    %2088 = vsyncpa %s2087, 1

</llo_original>
